<compile_context>
chip_gen: v5e
topology: v5e:2x2
jax: 0.10.0
libtpu: 0.0.40
codegen_flags: <defaults>
</compile_context>

<pallas_src>
import functools
import math

import jax
import jax.numpy as jnp
from jax.experimental import pallas as pl
from jax.experimental.pallas import tpu as pltpu


# ----------------------------------------------------------------------------
# hardware / tuning helpers
# ----------------------------------------------------------------------------
_VMEM_CACHE = None


def _vmem_bytes():
    """Per-core VMEM capacity (conservative 64 MiB default for v7x)."""
    global _VMEM_CACHE
    if _VMEM_CACHE is None:
        cap = 64 * 1024 * 1024
        try:
            info = pltpu.get_tpu_info()
            for attr in ("vmem_capacity_bytes", "vmem_size_bytes", "vmem_bytes"):
                v = getattr(info, attr, None)
                if v:
                    cap = int(v)
                    break
        except Exception:
            pass
        _VMEM_CACHE = cap
    return _VMEM_CACHE


def _vmem_limit(est_bytes):
    """Explicit scoped-VMEM limit: 2x block footprint + headroom, clamped."""
    hi = min(_vmem_bytes() - (4 << 20), 128 << 20)
    lo = min(32 << 20, hi)
    val = 2 * int(est_bytes) + (4 << 20)
    return int(min(max(val, lo), hi))


def _cparams(est_bytes, n_axes=1):
    return pltpu.CompilerParams(
        dimension_semantics=("parallel",) * n_axes,
        vmem_limit_bytes=_vmem_limit(est_bytes),
    )


def _tile_m(M):
    """Largest M-tile dividing M; cap depends on VMEM generation (v7x: 256)."""
    cap = 512 if _vmem_bytes() >= (100 << 20) else 256
    for t in (512, 256, 128, 64, 32, 16, 8):
        if t <= cap and M % t == 0:
            return t
    # TODO(synk): M not divisible by 8 disables tiling; pad B*T upstream for production.
    return M


def _batch_block(B, T, target_rows=256, max_rows=1024):
    """Batch elements per grid step: fill the MXU M dim (bb*T >= 256) while
    keeping >= 4 grid steps when possible and bounding the activation tile."""
    divs = [d for d in range(1, B + 1) if B % d == 0]
    ok = [d for d in divs if d * T <= max_rows] or [1]
    for d in ok:
        if d * T >= target_rows and B // d >= 4:
            return d
    for d in ok:
        if d * T >= target_rows:
            return d
    return ok[-1]


# --- single-buffered constant blocks (pl.Buffered(1)), probed once ----------
_BUFFERED_OK = None


def _probe_buffered_one():
    if not hasattr(pl, "Buffered"):
        return False
    try:
        def k(a_ref, w_ref, o_ref):
            o_ref[...] = a_ref[...] + w_ref[...]

        f = pl.pallas_call(
            k,
            out_shape=jax.ShapeDtypeStruct((8, 128), jnp.float32),
            grid=(2,),
            in_specs=[
                pl.BlockSpec((8, 128), lambda i: (0, 0)),
                pl.BlockSpec((8, 128), lambda i: (0, 0),
                             pipeline_mode=pl.Buffered(buffer_count=1)),
            ],
            out_specs=pl.BlockSpec((8, 128), lambda i: (0, 0)),
        )
        jax.block_until_ready(
            f(jnp.ones((8, 128), jnp.float32), jnp.ones((8, 128), jnp.float32)))
        return True
    except Exception:
        return False


def _buffered_ok():
    global _BUFFERED_OK
    if _BUFFERED_OK is None:
        _BUFFERED_OK = _probe_buffered_one()
    return _BUFFERED_OK


def _const_spec(shape):
    """BlockSpec for a weight/bias block whose index_map is constant.

    Single-buffered (halves resident weight VMEM — the main v7x fitting lever);
    falls back to the default pipeline if Buffered(1) is unsupported."""
    idx = lambda *args: (0,) * len(shape)
    if _buffered_ok():
        return pl.BlockSpec(shape, idx, pipeline_mode=pl.Buffered(buffer_count=1))
    return pl.BlockSpec(shape, idx)


# ----------------------------------------------------------------------------
# Pallas kernels
# ----------------------------------------------------------------------------
def _layernorm(x, g, b, eps=1e-5):
    mean = jnp.mean(x, axis=-1, keepdims=True)
    var = jnp.mean((x - mean) * (x - mean), axis=-1, keepdims=True)
    return (x - mean) * jax.lax.rsqrt(var + eps) * g + b


def conv_embed_kernel(x_ref, wp_ref, wc_ref, wn_ref, b_ref, pe_ref, o_ref, *, bb, T):
    # Circular Conv1d(k=3, pad=1):  out[t] = W0 x[t-1] + W1 x[t] + W2 x[t+1]
    # (padding_mode='circular' => wrap).  Taps built in-kernel; input read once.
    x = x_ref[...]                                     # (bb, T, C) f32
    C = x.shape[-1]
    H = o_ref.shape[-1]
    xp = jnp.roll(x, 1, axis=1)                        # x[t-1] (circular, per batch elem)
    xn = jnp.roll(x, -1, axis=1)                       # x[t+1]
    # TODO(synk): the (bb,T,C)->(bb*T,C) merge is layout-free only for T % 8 == 0.
    x2 = x.reshape(bb * T, C).astype(jnp.bfloat16)
    xp2 = xp.reshape(bb * T, C).astype(jnp.bfloat16)
    xn2 = xn.reshape(bb * T, C).astype(jnp.bfloat16)
    y = jnp.dot(xp2, wp_ref[...], preferred_element_type=jnp.float32)
    y = y + jnp.dot(x2, wc_ref[...], preferred_element_type=jnp.float32)
    y = y + jnp.dot(xn2, wn_ref[...], preferred_element_type=jnp.float32)
    y = y + b_ref[...]                                 # (bb*T, H) + (1, H)
    y = y.reshape(bb, T, H) + pe_ref[...]              # + (T, H) positional table
    o_ref[...] = y


def layer_kernel(h_ref, wqkv_ref, bqkv_ref, wout_ref, bout_ref, g1_ref, beta1_ref,
                 wff1_ref, bff1_ref, wff2_ref, bff2_ref, g2_ref, beta2_ref,
                 o_ref, attn_scr, *, n_heads, bb, T):
    # Fully fused post-LN transformer encoder layer over a (bb*T, H) block:
    #   QKV proj -> per-batch-element multi-head attention (heads accumulate
    #   straight into the output projection) -> +residual -> LN1 ->
    #   FF1(relu) -> FF2 -> +residual -> LN2.
    h = h_ref[...]                                     # (bb*T, H) f32
    H = h.shape[-1]
    Dh = H // n_heads
    hb = h.astype(jnp.bfloat16)
    # 1/sqrt(Dh) is pre-folded into the Q columns of w_qkv / b_qkv at init time.
    qkv = jnp.dot(hb, wqkv_ref[...],
                  preferred_element_type=jnp.float32) + bqkv_ref[...]   # (bb*T, 3H)

    # TODO(synk): full (T, T) scores per head; switch to flash-style KV blocking
    # (online softmax) for long sequences (T >~ 1-2K) to cap VMEM on v7x.
    # TODO(synk): per-head lane slices are 128-aligned only when Dh % 128 == 0;
    # for production pick Dh a multiple of 128 or process heads in 128-wide groups.
    for b in range(bb):                                # static batch-element loop
        rows = slice(b * T, (b + 1) * T)
        q = qkv[rows, :H]
        k = qkv[rows, H:2 * H]
        v = qkv[rows, 2 * H:]
        acc = jnp.zeros((T, H), jnp.float32)
        for hd in range(n_heads):                      # static head loop
            cs = slice(hd * Dh, (hd + 1) * Dh)
            qh = q[:, cs].astype(jnp.bfloat16)
            kh = k[:, cs].astype(jnp.bfloat16)
            vh = v[:, cs].astype(jnp.bfloat16)
            s = jax.lax.dot_general(qh, kh, (((1,), (1,)), ((), ())),
                                    preferred_element_type=jnp.float32)  # (T, T)
            m = jnp.max(s, axis=-1, keepdims=True)
            p = jnp.exp(s - m)
            p = p * pl.reciprocal(jnp.sum(p, axis=-1, keepdims=True), approx=True)
            head = jnp.dot(p.astype(jnp.bfloat16), vh,
                           preferred_element_type=jnp.float32)           # (T, Dh)
            # accumulate head straight into the output projection (no concat)
            acc = acc + jnp.dot(head.astype(jnp.bfloat16), wout_ref[cs, :],
                                preferred_element_type=jnp.float32)      # (T, H)
        attn_scr[rows, :] = acc + bout_ref[...]

    h1 = _layernorm(h + attn_scr[...], g1_ref[...], beta1_ref[...])
    f = jnp.dot(h1.astype(jnp.bfloat16), wff1_ref[...],
                preferred_element_type=jnp.float32) + bff1_ref[...]
    f = jnp.maximum(f, 0.0)
    f = jnp.dot(f.astype(jnp.bfloat16), wff2_ref[...],
                preferred_element_type=jnp.float32) + bff2_ref[...]
    o_ref[...] = _layernorm(h1 + f, g2_ref[...], beta2_ref[...])


def decoder_loss_kernel(h_ref, wt_ref, bt_ref, wd_ref, bd_ref, x_ref,
                        logits_ref, loss_ref):
    # Fused: Trans output projection + decoder + per-row MSE loss.
    h = h_ref[...]
    t = jnp.dot(h.astype(jnp.bfloat16), wt_ref[...],
                preferred_element_type=jnp.float32) + bt_ref[...]
    logits = jnp.dot(t.astype(jnp.bfloat16), wd_ref[...],
                     preferred_element_type=jnp.float32) + bd_ref[...]
    # TODO(synk): if production log_c < 128, pad/pack the C axis for unmasked stores.
    logits_ref[...] = logits
    diff = logits - x_ref[...]                          # (tm, C)
    sq = diff * diff
    C = sq.shape[-1]
    # Row-mean as a (1,C) x (tm,C)^T MXU dot -> lane-dense (1, tm) loss row,
    # avoiding both the (tm,1) masked-store column and a sublane->lane relayout.
    w_mean = jnp.full((1, C), 1.0 / C, dtype=jnp.float32)
    loss_ref[...] = jax.lax.dot_general(w_mean, sq, (((1,), (1,)), ((), ())),
                                        preferred_element_type=jnp.float32)


# ----------------------------------------------------------------------------
# pallas_call wrappers
# ----------------------------------------------------------------------------
def conv_embed(x, wp, wc, wn, b, pe, bb):
    B, T, C = x.shape
    H = wp.shape[1]
    est = (2 * 3 * C * H + 4 * T * H
           + 4 * bb * T * (2 * C + 2 * H) + 4 * bb * T * (3 * C + H))
    out = pl.pallas_call(
        functools.partial(conv_embed_kernel, bb=bb, T=T),
        out_shape=jax.ShapeDtypeStruct((B, T, H), jnp.float32),
        grid=(B // bb,),
        in_specs=[
            pl.BlockSpec((bb, T, C), lambda i: (i, 0, 0)),
            _const_spec((C, H)),
            _const_spec((C, H)),
            _const_spec((C, H)),
            _const_spec((1, H)),
            _const_spec((T, H)),        # (T, H) PE table, no (B*T, H) broadcast
        ],
        out_specs=pl.BlockSpec((bb, T, H), lambda i: (i, 0, 0)),
        compiler_params=_cparams(est),
    )(x, wp, wc, wn, b, pe)
    return out.reshape(B * T, H)


def transformer_layer(h, p, B, T, bb, n_heads):
    M, H = h.shape
    F = p["w_ff1"].shape[1]
    est = (2 * (3 * H * H + H * H + 2 * H * F)                 # bf16 weights, 1-buffered
           + 4 * bb * T * (4 * H + 3 * H + F + H)              # h in/out (x2), qkv, ffn, scratch
           + 4 * 2 * T * T)                                    # live attention scores
    return pl.pallas_call(
        functools.partial(layer_kernel, n_heads=n_heads, bb=bb, T=T),
        out_shape=jax.ShapeDtypeStruct((M, H), jnp.float32),
        grid=(B // bb,),
        in_specs=[
            pl.BlockSpec((bb * T, H), lambda i: (i, 0)),
            _const_spec((H, 3 * H)),
            _const_spec((1, 3 * H)),
            _const_spec((H, H)),
            _const_spec((1, H)),
            _const_spec((1, H)),
            _const_spec((1, H)),
            _const_spec((H, F)),
            _const_spec((1, F)),
            _const_spec((F, H)),
            _const_spec((1, H)),
            _const_spec((1, H)),
            _const_spec((1, H)),
        ],
        out_specs=pl.BlockSpec((bb * T, H), lambda i: (i, 0)),
        scratch_shapes=[pltpu.VMEM((bb * T, H), jnp.float32)],
        compiler_params=_cparams(est),
    )(h, p["w_qkv"], p["b_qkv"], p["w_out"], p["b_out"], p["ln1_g"], p["ln1_b"],
      p["w_ff1"], p["b_ff1"], p["w_ff2"], p["b_ff2"], p["ln2_g"], p["ln2_b"])


def decoder_with_loss(h, wt, bt, wd, bd, x_target):
    M, H = h.shape
    C = wd.shape[1]
    tm = _tile_m(M)
    n_tiles = M // tm
    est = 2 * (H * H + H * C) + 4 * tm * (2 * H + 4 * C + 2) + 4 * (2 * H + 2 * C)
    logits, loss = pl.pallas_call(
        decoder_loss_kernel,
        out_shape=(
            jax.ShapeDtypeStruct((M, C), jnp.float32),
            jax.ShapeDtypeStruct((n_tiles, tm), jnp.float32),   # lane-dense loss rows
        ),
        grid=(n_tiles,),
        in_specs=[
            pl.BlockSpec((tm, H), lambda i: (i, 0)),
            _const_spec((H, H)),
            _const_spec((1, H)),
            _const_spec((H, C)),
            _const_spec((1, C)),
            pl.BlockSpec((tm, C), lambda i: (i, 0)),
        ],
        out_specs=(
            pl.BlockSpec((tm, C), lambda i: (i, 0)),
            pl.BlockSpec((1, tm), lambda i: (i, 0)),
        ),
        compiler_params=_cparams(est),
    )(h, wt, bt, wd, bd, x_target)
    return logits, loss.reshape(M)


# ----------------------------------------------------------------------------
# model glue (plain JAX)
# ----------------------------------------------------------------------------
def positional_embedding(seq_len, d_model):
    # TODO(synk): assumes even d_model (as the PyTorch PositionalEmbedding does).
    position = jnp.arange(seq_len, dtype=jnp.float32)[:, None]
    div_term = jnp.exp(
        jnp.arange(0, d_model, 2, dtype=jnp.float32) * (-math.log(10000.0) / d_model))
    pe = jnp.zeros((seq_len, d_model), jnp.float32)
    pe = pe.at[:, 0::2].set(jnp.sin(position * div_term))
    pe = pe.at[:, 1::2].set(jnp.cos(position * div_term))
    return pe


def log_model_forward(params, log_features, n_heads):
    """Mirrors LogModel.forward({'log_features': x}) -> {'loss', 'output'}."""
    B, T, C = log_features.shape
    H = params["conv_wc"].shape[1]
    bb = _batch_block(B, T)

    pe = positional_embedding(T, H)                                      # (T, H)
    h = conv_embed(log_features, params["conv_wp"], params["conv_wc"],
                   params["conv_wn"], params["conv_b"], pe, bb)          # (B*T, H)

    for layer in params["layers"]:
        h = transformer_layer(h, layer, B, T, bb, n_heads)

    logits2d, loss1d = decoder_with_loss(
        h, params["trans_out_w"], params["trans_out_b"],
        params["dec_w"], params["dec_b"], log_features.reshape(B * T, C))
    return {
        "loss": loss1d.reshape(B, T),
        "output": logits2d.reshape(B, T, C),
    }


def init_params(key, log_c, hidden, ffn, n_layers, n_heads):
    keys = iter(jax.random.split(key, 8 + 8 * n_layers))

    def w(shape, scale=0.05):
        return scale * jax.random.normal(next(keys), shape, jnp.float32)

    attn_scale = 1.0 / math.sqrt(hidden // n_heads)

    # matmul weights stored bf16 (MXU operands / half HBM traffic);
    # biases & LN params stay f32.  Conv1d weight (H, C, 3) stored as three
    # pre-transposed (C, H) tap matrices: tap 0 -> x[t-1], 1 -> x[t], 2 -> x[t+1]
    # (PyTorch cross-correlation with circular pad=1).
    params = {
        "conv_wp": w((log_c, hidden)).astype(jnp.bfloat16),
        "conv_wc": w((log_c, hidden)).astype(jnp.bfloat16),
        "conv_wn": w((log_c, hidden)).astype(jnp.bfloat16),
        "conv_b": w((1, hidden)),
        "trans_out_w": w((hidden, hidden)).astype(jnp.bfloat16),
        "trans_out_b": jnp.zeros((1, hidden), jnp.float32),
        "dec_w": w((hidden, log_c)).astype(jnp.bfloat16),
        "dec_b": jnp.zeros((1, log_c), jnp.float32),
        "layers": [],
    }
    for _ in range(n_layers):
        w_qkv = w((hidden, 3 * hidden))
        b_qkv = jnp.zeros((1, 3 * hidden), jnp.float32)
        # Fold the 1/sqrt(Dh) attention scale into the Q projection (weight AND
        # bias) once at init time -> no per-step in-kernel scale multiply.
        w_qkv = w_qkv.at[:, :hidden].multiply(attn_scale)
        b_qkv = b_qkv.at[:, :hidden].multiply(attn_scale)
        params["layers"].append({
            "w_qkv": w_qkv.astype(jnp.bfloat16),
            "b_qkv": b_qkv,
            "w_out": w((hidden, hidden)).astype(jnp.bfloat16),
            "b_out": jnp.zeros((1, hidden), jnp.float32),
            "ln1_g": jnp.ones((1, hidden), jnp.float32),
            "ln1_b": jnp.zeros((1, hidden), jnp.float32),
            "w_ff1": w((hidden, ffn)).astype(jnp.bfloat16),
            "b_ff1": jnp.zeros((1, ffn), jnp.float32),
            "w_ff2": w((ffn, hidden)).astype(jnp.bfloat16),
            "b_ff2": jnp.zeros((1, hidden), jnp.float32),
            "ln2_g": jnp.ones((1, hidden), jnp.float32),
            "ln2_b": jnp.zeros((1, hidden), jnp.float32),
        })
    return params


if __name__ == "__main__":
    B, T, LOG_C = 2, 8, 4            # batch, sequence length, log channels
    HIDDEN, FFN = 32, 64             # hidden_size, transformer_hidden
    LAYERS, HEADS = 2, 4             # log_layer_num, attention heads

    _buffered_ok()                   # probe pl.Buffered(1) support once, outside jit

    x = jax.random.normal(jax.random.PRNGKey(0), (B, T, LOG_C), jnp.float32)
    params = init_params(jax.random.PRNGKey(42), LOG_C, HIDDEN, FFN, LAYERS, HEADS)

    fwd = jax.jit(functools.partial(log_model_forward, n_heads=HEADS))
    out = fwd(params, x)
    jax.block_until_ready(out)

    assert out["output"].shape == (B, T, LOG_C)
    assert out["loss"].shape == (B, T)
    assert bool(jnp.all(jnp.isfinite(out["output"])))
    assert bool(jnp.all(jnp.isfinite(out["loss"])))
    print("KERNEL_OK")
</pallas_src>

<mosaic_0001>
module attributes {stable_mosaic.version = 11 : i64} {
  func.func @k(%arg0: i32, %arg1: memref<8x128xf32, #tpu.memory_space<vmem>>, %arg2: memref<8x128xf32, #tpu.memory_space<vmem>>, %arg3: memref<8x128xf32, #tpu.memory_space<vmem>>) attributes {dimension_semantics = [#tpu.dimension_semantics<arbitrary>], iteration_bounds = array<i64: 2>, scalar_prefetch = 0 : i64, scratch_operands = 0 : i64, tpu.core_type = #tpu.core_type<tc>, window_params = [{pipeline_mode = #tpu.pipeline_mode<synchronous>, transform_indices = @transform_0, window_bounds = array<i64: 8, 128>}, {pipeline_mode = #tpu.pipeline_mode<synchronous>, transform_indices = @transform_1, window_bounds = array<i64: 8, 128>}, {pipeline_mode = #tpu.pipeline_mode<synchronous>, transform_indices = @transform_2, window_bounds = array<i64: 8, 128>}]} {
    %c0 = arith.constant 0 : index
    %c0_0 = arith.constant 0 : index
    %0 = vector.load %arg1[%c0, %c0_0] : memref<8x128xf32, #tpu.memory_space<vmem>>, vector<8x128xf32>
    %c0_1 = arith.constant 0 : index
    %c0_2 = arith.constant 0 : index
    %1 = vector.load %arg2[%c0_1, %c0_2] : memref<8x128xf32, #tpu.memory_space<vmem>>, vector<8x128xf32>
    %2 = arith.addf %0, %1 : vector<8x128xf32>
    %c0_3 = arith.constant 0 : index
    %c0_4 = arith.constant 0 : index
    %3 = vector.load %arg3[%c0_3, %c0_4] : memref<8x128xf32, #tpu.memory_space<vmem>>, vector<8x128xf32>
    tpu.vector_store %arg3[%c0_3, %c0_4], %2 {strides = array<i32>} : memref<8x128xf32, #tpu.memory_space<vmem>>, vector<8x128xf32>,
    return
  }
  func.func @transform_0(%arg0: i32) -> (i32, i32) {
    %c0_i32 = arith.constant 0 : i32
    %c0_i32_0 = arith.constant 0 : i32
    %c0_i32_1 = arith.constant 0 : i32
    return %c0_i32, %c0_i32_0 : i32, i32
  }
  func.func @transform_1(%arg0: i32) -> (i32, i32) {
    %c0_i32 = arith.constant 0 : i32
    %c0_i32_0 = arith.constant 0 : i32
    %c0_i32_1 = arith.constant 0 : i32
    return %c0_i32, %c0_i32_0 : i32, i32
  }
  func.func @transform_2(%arg0: i32) -> (i32, i32) {
    %c0_i32 = arith.constant 0 : i32
    %c0_i32_0 = arith.constant 0 : i32
    %c0_i32_1 = arith.constant 0 : i32
    return %c0_i32, %c0_i32_0 : i32, i32
  }
}

module attributes {stable_mosaic.version = 11 : i64} {
  func.func @conv_embed_kernel(%arg0: i32, %arg1: memref<2x8x4xf32, #tpu.memory_space<vmem>>, %arg2: memref<4x32xbf16, #tpu.memory_space<vmem>>, %arg3: memref<4x32xbf16, #tpu.memory_space<vmem>>, %arg4: memref<4x32xbf16, #tpu.memory_space<vmem>>, %arg5: memref<1x32xf32, #tpu.memory_space<vmem>>, %arg6: memref<8x32xf32, #tpu.memory_space<vmem>>, %arg7: memref<2x8x32xf32, #tpu.memory_space<vmem>>) attributes {dimension_semantics = [#tpu.dimension_semantics<parallel>], iteration_bounds = array<i64: 1>, scalar_prefetch = 0 : i64, scratch_operands = 0 : i64, tpu.core_type = #tpu.core_type<tc>, window_params = [{transform_indices = @transform_0, window_bounds = array<i64: 2, 8, 4>}, {pipeline_mode = #tpu.pipeline_mode<synchronous>, transform_indices = @transform_1, window_bounds = array<i64: 4, 32>}, {pipeline_mode = #tpu.pipeline_mode<synchronous>, transform_indices = @transform_2, window_bounds = array<i64: 4, 32>}, {pipeline_mode = #tpu.pipeline_mode<synchronous>, transform_indices = @transform_3, window_bounds = array<i64: 4, 32>}, {pipeline_mode = #tpu.pipeline_mode<synchronous>, transform_indices = @transform_4, window_bounds = array<i64: 1, 32>}, {pipeline_mode = #tpu.pipeline_mode<synchronous>, transform_indices = @transform_5, window_bounds = array<i64: 8, 32>}, {transform_indices = @transform_6, window_bounds = array<i64: 2, 8, 32>}]} {
    %c0 = arith.constant 0 : index
    %c0_0 = arith.constant 0 : index
    %c0_1 = arith.constant 0 : index
    %0 = vector.load %arg1[%c0, %c0_0, %c0_1] : memref<2x8x4xf32, #tpu.memory_space<vmem>>, vector<2x8x4xf32>
    %1 = vector.extract_strided_slice %0 {offsets = [0, 7, 0], sizes = [2, 1, 4], strides = [1, 1, 1]} : vector<2x8x4xf32> to vector<2x1x4xf32>
    %2 = vector.extract_strided_slice %0 {offsets = [0, 0, 0], sizes = [2, 7, 4], strides = [1, 1, 1]} : vector<2x8x4xf32> to vector<2x7x4xf32>
    %3 = tpu.concatenate %1, %2 in 1 : vector<2x1x4xf32>, vector<2x7x4xf32> -> vector<2x8x4xf32>
    %4 = vector.extract_strided_slice %0 {offsets = [0, 1, 0], sizes = [2, 7, 4], strides = [1, 1, 1]} : vector<2x8x4xf32> to vector<2x7x4xf32>
    %5 = vector.extract_strided_slice %0 {offsets = [0, 0, 0], sizes = [2, 1, 4], strides = [1, 1, 1]} : vector<2x8x4xf32> to vector<2x1x4xf32>
    %6 = tpu.concatenate %4, %5 in 1 : vector<2x7x4xf32>, vector<2x1x4xf32> -> vector<2x8x4xf32>
    %7 = vector.shape_cast %0 : vector<2x8x4xf32> to vector<16x4xf32>
    %8 = arith.truncf %7 : vector<16x4xf32> to vector<16x4xbf16>
    %9 = vector.shape_cast %3 : vector<2x8x4xf32> to vector<16x4xf32>
    %10 = arith.truncf %9 : vector<16x4xf32> to vector<16x4xbf16>
    %11 = vector.shape_cast %6 : vector<2x8x4xf32> to vector<16x4xf32>
    %12 = arith.truncf %11 : vector<16x4xf32> to vector<16x4xbf16>
    %c0_2 = arith.constant 0 : index
    %c0_3 = arith.constant 0 : index
    %13 = vector.load %arg2[%c0_2, %c0_3] : memref<4x32xbf16, #tpu.memory_space<vmem>>, vector<4x32xbf16>
    %cst = arith.constant dense<0.000000e+00> : vector<16x32xf32>
    %14 = tpu.matmul %10, %13, %cst {dimension_numbers = #tpu.dot_dimension_numbers<[1], [0], [0], [1], [0, 0, 1, 1], [], []>} : vector<16x4xbf16>, vector<4x32xbf16>, vector<16x32xf32> -> vector<16x32xf32>
    %c0_4 = arith.constant 0 : index
    %c0_5 = arith.constant 0 : index
    %15 = vector.load %arg3[%c0_4, %c0_5] : memref<4x32xbf16, #tpu.memory_space<vmem>>, vector<4x32xbf16>
    %cst_6 = arith.constant dense<0.000000e+00> : vector<16x32xf32>
    %16 = tpu.matmul %8, %15, %cst_6 {dimension_numbers = #tpu.dot_dimension_numbers<[1], [0], [0], [1], [0, 0, 1, 1], [], []>} : vector<16x4xbf16>, vector<4x32xbf16>, vector<16x32xf32> -> vector<16x32xf32>
    %17 = arith.addf %14, %16 : vector<16x32xf32>
    %c0_7 = arith.constant 0 : index
    %c0_8 = arith.constant 0 : index
    %18 = vector.load %arg4[%c0_7, %c0_8] : memref<4x32xbf16, #tpu.memory_space<vmem>>, vector<4x32xbf16>
    %cst_9 = arith.constant dense<0.000000e+00> : vector<16x32xf32>
    %19 = tpu.matmul %12, %18, %cst_9 {dimension_numbers = #tpu.dot_dimension_numbers<[1], [0], [0], [1], [0, 0, 1, 1], [], []>} : vector<16x4xbf16>, vector<4x32xbf16>, vector<16x32xf32> -> vector<16x32xf32>
    %20 = arith.addf %17, %19 : vector<16x32xf32>
    %c0_10 = arith.constant 0 : index
    %c0_11 = arith.constant 0 : index
    %21 = vector.load %arg5[%c0_10, %c0_11] : memref<1x32xf32, #tpu.memory_space<vmem>>, vector<1x32xf32>
    %22 = vector.broadcast %21 : vector<1x32xf32> to vector<16x32xf32>
    %23 = arith.addf %20, %22 : vector<16x32xf32>
    %24 = vector.shape_cast %23 : vector<16x32xf32> to vector<2x8x32xf32>
    %c0_12 = arith.constant 0 : index
    %c0_13 = arith.constant 0 : index
    %25 = vector.load %arg6[%c0_12, %c0_13] : memref<8x32xf32, #tpu.memory_space<vmem>>, vector<8x32xf32>
    %26 = vector.shape_cast %25 : vector<8x32xf32> to vector<1x8x32xf32>
    %27 = vector.broadcast %26 : vector<1x8x32xf32> to vector<2x8x32xf32>
    %28 = arith.addf %24, %27 : vector<2x8x32xf32>
    %c0_14 = arith.constant 0 : index
    %c0_15 = arith.constant 0 : index
    %c0_16 = arith.constant 0 : index
    %29 = vector.load %arg7[%c0_14, %c0_15, %c0_16] : memref<2x8x32xf32, #tpu.memory_space<vmem>>, vector<2x8x32xf32>
    tpu.vector_store %arg7[%c0_14, %c0_15, %c0_16], %28 {strides = array<i32>} : memref<2x8x32xf32, #tpu.memory_space<vmem>>, vector<2x8x32xf32>,
    return
  }
  func.func @transform_0(%arg0: i32) -> (i32, i32, i32) {
    %c0_i32 = arith.constant 0 : i32
    %c0_i32_0 = arith.constant 0 : i32
    %c0_i32_1 = arith.constant 0 : i32
    return %arg0, %c0_i32, %c0_i32_0 : i32, i32, i32
  }
  func.func @transform_1(%arg0: i32) -> (i32, i32) {
    %c0_i32 = arith.constant 0 : i32
    %c0_i32_0 = arith.constant 0 : i32
    %c0_i32_1 = arith.constant 0 : i32
    return %c0_i32, %c0_i32_0 : i32, i32
  }
  func.func @transform_2(%arg0: i32) -> (i32, i32) {
    %c0_i32 = arith.constant 0 : i32
    %c0_i32_0 = arith.constant 0 : i32
    %c0_i32_1 = arith.constant 0 : i32
    return %c0_i32, %c0_i32_0 : i32, i32
  }
  func.func @transform_3(%arg0: i32) -> (i32, i32) {
    %c0_i32 = arith.constant 0 : i32
    %c0_i32_0 = arith.constant 0 : i32
    %c0_i32_1 = arith.constant 0 : i32
    return %c0_i32, %c0_i32_0 : i32, i32
  }
  func.func @transform_4(%arg0: i32) -> (i32, i32) {
    %c0_i32 = arith.constant 0 : i32
    %c0_i32_0 = arith.constant 0 : i32
    %c0_i32_1 = arith.constant 0 : i32
    return %c0_i32, %c0_i32_0 : i32, i32
  }
  func.func @transform_5(%arg0: i32) -> (i32, i32) {
    %c0_i32 = arith.constant 0 : i32
    %c0_i32_0 = arith.constant 0 : i32
    %c0_i32_1 = arith.constant 0 : i32
    return %c0_i32, %c0_i32_0 : i32, i32
  }
  func.func @transform_6(%arg0: i32) -> (i32, i32, i32) {
    %c0_i32 = arith.constant 0 : i32
    %c0_i32_0 = arith.constant 0 : i32
    %c0_i32_1 = arith.constant 0 : i32
    return %arg0, %c0_i32, %c0_i32_0 : i32, i32, i32
  }
}

module attributes {stable_mosaic.version = 11 : i64} {
  func.func @decoder_loss_kernel(%arg0: i32, %arg1: memref<16x32xf32, #tpu.memory_space<vmem>>, %arg2: memref<32x32xbf16, #tpu.memory_space<vmem>>, %arg3: memref<1x32xf32, #tpu.memory_space<vmem>>, %arg4: memref<32x4xbf16, #tpu.memory_space<vmem>>, %arg5: memref<1x4xf32, #tpu.memory_space<vmem>>, %arg6: memref<16x4xf32, #tpu.memory_space<vmem>>, %arg7: memref<16x4xf32, #tpu.memory_space<vmem>>, %arg8: memref<1x16xf32, #tpu.memory_space<vmem>>) attributes {dimension_semantics = [#tpu.dimension_semantics<parallel>], iteration_bounds = array<i64: 1>, scalar_prefetch = 0 : i64, scratch_operands = 0 : i64, tpu.core_type = #tpu.core_type<tc>, window_params = [{transform_indices = @transform_0, window_bounds = array<i64: 16, 32>}, {pipeline_mode = #tpu.pipeline_mode<synchronous>, transform_indices = @transform_1, window_bounds = array<i64: 32, 32>}, {pipeline_mode = #tpu.pipeline_mode<synchronous>, transform_indices = @transform_2, window_bounds = array<i64: 1, 32>}, {pipeline_mode = #tpu.pipeline_mode<synchronous>, transform_indices = @transform_3, window_bounds = array<i64: 32, 4>}, {pipeline_mode = #tpu.pipeline_mode<synchronous>, transform_indices = @transform_4, window_bounds = array<i64: 1, 4>}, {transform_indices = @transform_5, window_bounds = array<i64: 16, 4>}, {transform_indices = @transform_6, window_bounds = array<i64: 16, 4>}, {transform_indices = @transform_7, window_bounds = array<i64: 1, 16>}]} {
    %c0 = arith.constant 0 : index
    %c0_0 = arith.constant 0 : index
    %0 = vector.load %arg1[%c0, %c0_0] : memref<16x32xf32, #tpu.memory_space<vmem>>, vector<16x32xf32>
    %1 = arith.truncf %0 : vector<16x32xf32> to vector<16x32xbf16>
    %c0_1 = arith.constant 0 : index
    %c0_2 = arith.constant 0 : index
    %2 = vector.load %arg2[%c0_1, %c0_2] : memref<32x32xbf16, #tpu.memory_space<vmem>>, vector<32x32xbf16>
    %cst = arith.constant dense<0.000000e+00> : vector<16x32xf32>
    %3 = tpu.matmul %1, %2, %cst {dimension_numbers = #tpu.dot_dimension_numbers<[1], [0], [0], [1], [0, 0, 1, 1], [], []>} : vector<16x32xbf16>, vector<32x32xbf16>, vector<16x32xf32> -> vector<16x32xf32>
    %c0_3 = arith.constant 0 : index
    %c0_4 = arith.constant 0 : index
    %4 = vector.load %arg3[%c0_3, %c0_4] : memref<1x32xf32, #tpu.memory_space<vmem>>, vector<1x32xf32>
    %5 = vector.broadcast %4 : vector<1x32xf32> to vector<16x32xf32>
    %6 = arith.addf %3, %5 : vector<16x32xf32>
    %7 = arith.truncf %6 : vector<16x32xf32> to vector<16x32xbf16>
    %c0_5 = arith.constant 0 : index
    %c0_6 = arith.constant 0 : index
    %8 = vector.load %arg4[%c0_5, %c0_6] : memref<32x4xbf16, #tpu.memory_space<vmem>>, vector<32x4xbf16>
    %cst_7 = arith.constant dense<0.000000e+00> : vector<16x4xf32>
    %9 = tpu.matmul %7, %8, %cst_7 {dimension_numbers = #tpu.dot_dimension_numbers<[1], [0], [0], [1], [0, 0, 1, 1], [], []>} : vector<16x32xbf16>, vector<32x4xbf16>, vector<16x4xf32> -> vector<16x4xf32>
    %c0_8 = arith.constant 0 : index
    %c0_9 = arith.constant 0 : index
    %10 = vector.load %arg5[%c0_8, %c0_9] : memref<1x4xf32, #tpu.memory_space<vmem>>, vector<1x4xf32>
    %11 = vector.broadcast %10 : vector<1x4xf32> to vector<16x4xf32>
    %12 = arith.addf %9, %11 : vector<16x4xf32>
    %c0_10 = arith.constant 0 : index
    %c0_11 = arith.constant 0 : index
    %13 = vector.load %arg7[%c0_10, %c0_11] : memref<16x4xf32, #tpu.memory_space<vmem>>, vector<16x4xf32>
    tpu.vector_store %arg7[%c0_10, %c0_11], %12 {strides = array<i32>} : memref<16x4xf32, #tpu.memory_space<vmem>>, vector<16x4xf32>,
    %c0_12 = arith.constant 0 : index
    %c0_13 = arith.constant 0 : index
    %14 = vector.load %arg6[%c0_12, %c0_13] : memref<16x4xf32, #tpu.memory_space<vmem>>, vector<16x4xf32>
    %15 = arith.subf %12, %14 : vector<16x4xf32>
    %16 = arith.mulf %15, %15 : vector<16x4xf32>
    %cst_14 = arith.constant 2.500000e-01 : f32
    %17 = vector.broadcast %cst_14 : f32 to vector<1x4xf32>
    %cst_15 = arith.constant dense<0.000000e+00> : vector<1x16xf32>
    %18 = tpu.matmul %17, %16, %cst_15 {dimension_numbers = #tpu.dot_dimension_numbers<[1], [1], [0], [0], [0, 0, 1, 0], [], []>} : vector<1x4xf32>, vector<16x4xf32>, vector<1x16xf32> -> vector<1x16xf32>
    %c0_16 = arith.constant 0 : index
    %c0_17 = arith.constant 0 : index
    %19 = vector.load %arg8[%c0_16, %c0_17] : memref<1x16xf32, #tpu.memory_space<vmem>>, vector<1x16xf32>
    tpu.vector_store %arg8[%c0_16, %c0_17], %18 {strides = array<i32>} : memref<1x16xf32, #tpu.memory_space<vmem>>, vector<1x16xf32>,
    return
  }
  func.func @transform_0(%arg0: i32) -> (i32, i32) {
    %c0_i32 = arith.constant 0 : i32
    %c0_i32_0 = arith.constant 0 : i32
    return %arg0, %c0_i32 : i32, i32
  }
  func.func @transform_1(%arg0: i32) -> (i32, i32) {
    %c0_i32 = arith.constant 0 : i32
    %c0_i32_0 = arith.constant 0 : i32
    %c0_i32_1 = arith.constant 0 : i32
    return %c0_i32, %c0_i32_0 : i32, i32
  }
  func.func @transform_2(%arg0: i32) -> (i32, i32) {
    %c0_i32 = arith.constant 0 : i32
    %c0_i32_0 = arith.constant 0 : i32
    %c0_i32_1 = arith.constant 0 : i32
    return %c0_i32, %c0_i32_0 : i32, i32
  }
  func.func @transform_3(%arg0: i32) -> (i32, i32) {
    %c0_i32 = arith.constant 0 : i32
    %c0_i32_0 = arith.constant 0 : i32
    %c0_i32_1 = arith.constant 0 : i32
    return %c0_i32, %c0_i32_0 : i32, i32
  }
  func.func @transform_4(%arg0: i32) -> (i32, i32) {
    %c0_i32 = arith.constant 0 : i32
    %c0_i32_0 = arith.constant 0 : i32
    %c0_i32_1 = arith.constant 0 : i32
    return %c0_i32, %c0_i32_0 : i32, i32
  }
  func.func @transform_5(%arg0: i32) -> (i32, i32) {
    %c0_i32 = arith.constant 0 : i32
    %c0_i32_0 = arith.constant 0 : i32
    return %arg0, %c0_i32 : i32, i32
  }
  func.func @transform_6(%arg0: i32) -> (i32, i32) {
    %c0_i32 = arith.constant 0 : i32
    %c0_i32_0 = arith.constant 0 : i32
    return %arg0, %c0_i32 : i32, i32
  }
  func.func @transform_7(%arg0: i32) -> (i32, i32) {
    %c0_i32 = arith.constant 0 : i32
    %c0_i32_0 = arith.constant 0 : i32
    return %arg0, %c0_i32 : i32, i32
  }
}

module attributes {stable_mosaic.version = 11 : i64} {
  func.func @layer_kernel(%arg0: i32, %arg1: memref<16x32xf32, #tpu.memory_space<vmem>>, %arg2: memref<32x96xbf16, #tpu.memory_space<vmem>>, %arg3: memref<1x96xf32, #tpu.memory_space<vmem>>, %arg4: memref<32x32xbf16, #tpu.memory_space<vmem>>, %arg5: memref<1x32xf32, #tpu.memory_space<vmem>>, %arg6: memref<1x32xf32, #tpu.memory_space<vmem>>, %arg7: memref<1x32xf32, #tpu.memory_space<vmem>>, %arg8: memref<32x64xbf16, #tpu.memory_space<vmem>>, %arg9: memref<1x64xf32, #tpu.memory_space<vmem>>, %arg10: memref<64x32xbf16, #tpu.memory_space<vmem>>, %arg11: memref<1x32xf32, #tpu.memory_space<vmem>>, %arg12: memref<1x32xf32, #tpu.memory_space<vmem>>, %arg13: memref<1x32xf32, #tpu.memory_space<vmem>>, %arg14: memref<16x32xf32, #tpu.memory_space<vmem>>, %arg15: memref<16x32xf32, #tpu.memory_space<vmem>>) attributes {dimension_semantics = [#tpu.dimension_semantics<parallel>], iteration_bounds = array<i64: 1>, scalar_prefetch = 0 : i64, scratch_operands = 1 : i64, tpu.core_type = #tpu.core_type<tc>, window_params = [{transform_indices = @transform_0, window_bounds = array<i64: 16, 32>}, {pipeline_mode = #tpu.pipeline_mode<synchronous>, transform_indices = @transform_1, window_bounds = array<i64: 32, 96>}, {pipeline_mode = #tpu.pipeline_mode<synchronous>, transform_indices = @transform_2, window_bounds = array<i64: 1, 96>}, {pipeline_mode = #tpu.pipeline_mode<synchronous>, transform_indices = @transform_3, window_bounds = array<i64: 32, 32>}, {pipeline_mode = #tpu.pipeline_mode<synchronous>, transform_indices = @transform_4, window_bounds = array<i64: 1, 32>}, {pipeline_mode = #tpu.pipeline_mode<synchronous>, transform_indices = @transform_5, window_bounds = array<i64: 1, 32>}, {pipeline_mode = #tpu.pipeline_mode<synchronous>, transform_indices = @transform_6, window_bounds = array<i64: 1, 32>}, {pipeline_mode = #tpu.pipeline_mode<synchronous>, transform_indices = @transform_7, window_bounds = array<i64: 32, 64>}, {pipeline_mode = #tpu.pipeline_mode<synchronous>, transform_indices = @transform_8, window_bounds = array<i64: 1, 64>}, {pipeline_mode = #tpu.pipeline_mode<synchronous>, transform_indices = @transform_9, window_bounds = array<i64: 64, 32>}, {pipeline_mode = #tpu.pipeline_mode<synchronous>, transform_indices = @transform_10, window_bounds = array<i64: 1, 32>}, {pipeline_mode = #tpu.pipeline_mode<synchronous>, transform_indices = @transform_11, window_bounds = array<i64: 1, 32>}, {pipeline_mode = #tpu.pipeline_mode<synchronous>, transform_indices = @transform_12, window_bounds = array<i64: 1, 32>}, {transform_indices = @transform_13, window_bounds = array<i64: 16, 32>}]} {
    %c0 = arith.constant 0 : index
    %c0_0 = arith.constant 0 : index
    %0 = vector.load %arg1[%c0, %c0_0] : memref<16x32xf32, #tpu.memory_space<vmem>>, vector<16x32xf32>
    %1 = arith.truncf %0 : vector<16x32xf32> to vector<16x32xbf16>
    %c0_1 = arith.constant 0 : index
    %c0_2 = arith.constant 0 : index
    %2 = vector.load %arg2[%c0_1, %c0_2] : memref<32x96xbf16, #tpu.memory_space<vmem>>, vector<32x96xbf16>
    %cst = arith.constant dense<0.000000e+00> : vector<16x96xf32>
    %3 = tpu.matmul %1, %2, %cst {dimension_numbers = #tpu.dot_dimension_numbers<[1], [0], [0], [1], [0, 0, 1, 1], [], []>} : vector<16x32xbf16>, vector<32x96xbf16>, vector<16x96xf32> -> vector<16x96xf32>
    %c0_3 = arith.constant 0 : index
    %c0_4 = arith.constant 0 : index
    %4 = vector.load %arg3[%c0_3, %c0_4] : memref<1x96xf32, #tpu.memory_space<vmem>>, vector<1x96xf32>
    %5 = vector.broadcast %4 : vector<1x96xf32> to vector<16x96xf32>
    %6 = arith.addf %3, %5 : vector<16x96xf32>
    %7 = vector.extract_strided_slice %6 {offsets = [0, 0], sizes = [8, 32], strides = [1, 1]} : vector<16x96xf32> to vector<8x32xf32>
    %8 = vector.extract_strided_slice %6 {offsets = [0, 32], sizes = [8, 32], strides = [1, 1]} : vector<16x96xf32> to vector<8x32xf32>
    %9 = vector.extract_strided_slice %6 {offsets = [0, 64], sizes = [8, 32], strides = [1, 1]} : vector<16x96xf32> to vector<8x32xf32>
    %cst_5 = arith.constant 0.000000e+00 : f32
    %10 = vector.broadcast %cst_5 : f32 to vector<8x32xf32>
    %11 = vector.extract_strided_slice %7 {offsets = [0, 0], sizes = [8, 8], strides = [1, 1]} : vector<8x32xf32> to vector<8x8xf32>
    %12 = arith.truncf %11 : vector<8x8xf32> to vector<8x8xbf16>
    %13 = vector.extract_strided_slice %8 {offsets = [0, 0], sizes = [8, 8], strides = [1, 1]} : vector<8x32xf32> to vector<8x8xf32>
    %14 = arith.truncf %13 : vector<8x8xf32> to vector<8x8xbf16>
    %15 = vector.extract_strided_slice %9 {offsets = [0, 0], sizes = [8, 8], strides = [1, 1]} : vector<8x32xf32> to vector<8x8xf32>
    %16 = arith.truncf %15 : vector<8x8xf32> to vector<8x8xbf16>
    %cst_6 = arith.constant dense<0.000000e+00> : vector<8x8xf32>
    %17 = tpu.matmul %12, %14, %cst_6 {dimension_numbers = #tpu.dot_dimension_numbers<[1], [1], [0], [0], [0, 0, 1, 0], [], []>} : vector<8x8xbf16>, vector<8x8xbf16>, vector<8x8xf32> -> vector<8x8xf32>
    %cst_7 = arith.constant dense<0xFF800000> : vector<8xf32>
    %18 = vector.multi_reduction <maximumf>, %17, %cst_7 [1] : vector<8x8xf32> to vector<8xf32>
    %19 = vector.shape_cast %18 : vector<8xf32> to vector<8x1xf32>
    %20 = vector.broadcast %19 : vector<8x1xf32> to vector<8x8xf32>
    %21 = arith.subf %17, %20 : vector<8x8xf32>
    %22 = math.exp %21 : vector<8x8xf32>
    %cst_8 = arith.constant dense<0.000000e+00> : vector<8xf32>
    %23 = vector.multi_reduction <add>, %22, %cst_8 [1] : vector<8x8xf32> to vector<8xf32>
    %24 = vector.shape_cast %23 : vector<8xf32> to vector<8x1xf32>
    %25 = tpu.reciprocal %24 {approx = true} : vector<8x1xf32> -> vector<8x1xf32>
    %26 = vector.broadcast %25 : vector<8x1xf32> to vector<8x8xf32>
    %27 = arith.mulf %22, %26 : vector<8x8xf32>
    %28 = arith.truncf %27 : vector<8x8xf32> to vector<8x8xbf16>
    %cst_9 = arith.constant dense<0.000000e+00> : vector<8x8xf32>
    %29 = tpu.matmul %28, %16, %cst_9 {dimension_numbers = #tpu.dot_dimension_numbers<[1], [0], [0], [1], [0, 0, 1, 1], [], []>} : vector<8x8xbf16>, vector<8x8xbf16>, vector<8x8xf32> -> vector<8x8xf32>
    %30 = arith.truncf %29 : vector<8x8xf32> to vector<8x8xbf16>
    %c0_10 = arith.constant 0 : index
    %c0_11 = arith.constant 0 : index
    %31 = vector.load %arg4[%c0_10, %c0_11] : memref<32x32xbf16, #tpu.memory_space<vmem>>, vector<8x32xbf16>
    %cst_12 = arith.constant dense<0.000000e+00> : vector<8x32xf32>
    %32 = tpu.matmul %30, %31, %cst_12 {dimension_numbers = #tpu.dot_dimension_numbers<[1], [0], [0], [1], [0, 0, 1, 1], [], []>} : vector<8x8xbf16>, vector<8x32xbf16>, vector<8x32xf32> -> vector<8x32xf32>
    %33 = arith.addf %10, %32 : vector<8x32xf32>
    %34 = vector.extract_strided_slice %7 {offsets = [0, 8], sizes = [8, 8], strides = [1, 1]} : vector<8x32xf32> to vector<8x8xf32>
    %35 = arith.truncf %34 : vector<8x8xf32> to vector<8x8xbf16>
    %36 = vector.extract_strided_slice %8 {offsets = [0, 8], sizes = [8, 8], strides = [1, 1]} : vector<8x32xf32> to vector<8x8xf32>
    %37 = arith.truncf %36 : vector<8x8xf32> to vector<8x8xbf16>
    %38 = vector.extract_strided_slice %9 {offsets = [0, 8], sizes = [8, 8], strides = [1, 1]} : vector<8x32xf32> to vector<8x8xf32>
    %39 = arith.truncf %38 : vector<8x8xf32> to vector<8x8xbf16>
    %cst_13 = arith.constant dense<0.000000e+00> : vector<8x8xf32>
    %40 = tpu.matmul %35, %37, %cst_13 {dimension_numbers = #tpu.dot_dimension_numbers<[1], [1], [0], [0], [0, 0, 1, 0], [], []>} : vector<8x8xbf16>, vector<8x8xbf16>, vector<8x8xf32> -> vector<8x8xf32>
    %cst_14 = arith.constant dense<0xFF800000> : vector<8xf32>
    %41 = vector.multi_reduction <maximumf>, %40, %cst_14 [1] : vector<8x8xf32> to vector<8xf32>
    %42 = vector.shape_cast %41 : vector<8xf32> to vector<8x1xf32>
    %43 = vector.broadcast %42 : vector<8x1xf32> to vector<8x8xf32>
    %44 = arith.subf %40, %43 : vector<8x8xf32>
    %45 = math.exp %44 : vector<8x8xf32>
    %cst_15 = arith.constant dense<0.000000e+00> : vector<8xf32>
    %46 = vector.multi_reduction <add>, %45, %cst_15 [1] : vector<8x8xf32> to vector<8xf32>
    %47 = vector.shape_cast %46 : vector<8xf32> to vector<8x1xf32>
    %48 = tpu.reciprocal %47 {approx = true} : vector<8x1xf32> -> vector<8x1xf32>
    %49 = vector.broadcast %48 : vector<8x1xf32> to vector<8x8xf32>
    %50 = arith.mulf %45, %49 : vector<8x8xf32>
    %51 = arith.truncf %50 : vector<8x8xf32> to vector<8x8xbf16>
    %cst_16 = arith.constant dense<0.000000e+00> : vector<8x8xf32>
    %52 = tpu.matmul %51, %39, %cst_16 {dimension_numbers = #tpu.dot_dimension_numbers<[1], [0], [0], [1], [0, 0, 1, 1], [], []>} : vector<8x8xbf16>, vector<8x8xbf16>, vector<8x8xf32> -> vector<8x8xf32>
    %53 = arith.truncf %52 : vector<8x8xf32> to vector<8x8xbf16>
    %c8 = arith.constant 8 : index
    %c0_17 = arith.constant 0 : index
    %54 = vector.load %arg4[%c8, %c0_17] : memref<32x32xbf16, #tpu.memory_space<vmem>>, vector<8x32xbf16>
    %cst_18 = arith.constant dense<0.000000e+00> : vector<8x32xf32>
    %55 = tpu.matmul %53, %54, %cst_18 {dimension_numbers = #tpu.dot_dimension_numbers<[1], [0], [0], [1], [0, 0, 1, 1], [], []>} : vector<8x8xbf16>, vector<8x32xbf16>, vector<8x32xf32> -> vector<8x32xf32>
    %56 = arith.addf %33, %55 : vector<8x32xf32>
    %57 = vector.extract_strided_slice %7 {offsets = [0, 16], sizes = [8, 8], strides = [1, 1]} : vector<8x32xf32> to vector<8x8xf32>
    %58 = arith.truncf %57 : vector<8x8xf32> to vector<8x8xbf16>
    %59 = vector.extract_strided_slice %8 {offsets = [0, 16], sizes = [8, 8], strides = [1, 1]} : vector<8x32xf32> to vector<8x8xf32>
    %60 = arith.truncf %59 : vector<8x8xf32> to vector<8x8xbf16>
    %61 = vector.extract_strided_slice %9 {offsets = [0, 16], sizes = [8, 8], strides = [1, 1]} : vector<8x32xf32> to vector<8x8xf32>
    %62 = arith.truncf %61 : vector<8x8xf32> to vector<8x8xbf16>
    %cst_19 = arith.constant dense<0.000000e+00> : vector<8x8xf32>
    %63 = tpu.matmul %58, %60, %cst_19 {dimension_numbers = #tpu.dot_dimension_numbers<[1], [1], [0], [0], [0, 0, 1, 0], [], []>} : vector<8x8xbf16>, vector<8x8xbf16>, vector<8x8xf32> -> vector<8x8xf32>
    %cst_20 = arith.constant dense<0xFF800000> : vector<8xf32>
    %64 = vector.multi_reduction <maximumf>, %63, %cst_20 [1] : vector<8x8xf32> to vector<8xf32>
    %65 = vector.shape_cast %64 : vector<8xf32> to vector<8x1xf32>
    %66 = vector.broadcast %65 : vector<8x1xf32> to vector<8x8xf32>
    %67 = arith.subf %63, %66 : vector<8x8xf32>
    %68 = math.exp %67 : vector<8x8xf32>
    %cst_21 = arith.constant dense<0.000000e+00> : vector<8xf32>
    %69 = vector.multi_reduction <add>, %68, %cst_21 [1] : vector<8x8xf32> to vector<8xf32>
    %70 = vector.shape_cast %69 : vector<8xf32> to vector<8x1xf32>
    %71 = tpu.reciprocal %70 {approx = true} : vector<8x1xf32> -> vector<8x1xf32>
    %72 = vector.broadcast %71 : vector<8x1xf32> to vector<8x8xf32>
    %73 = arith.mulf %68, %72 : vector<8x8xf32>
    %74 = arith.truncf %73 : vector<8x8xf32> to vector<8x8xbf16>
    %cst_22 = arith.constant dense<0.000000e+00> : vector<8x8xf32>
    %75 = tpu.matmul %74, %62, %cst_22 {dimension_numbers = #tpu.dot_dimension_numbers<[1], [0], [0], [1], [0, 0, 1, 1], [], []>} : vector<8x8xbf16>, vector<8x8xbf16>, vector<8x8xf32> -> vector<8x8xf32>
    %76 = arith.truncf %75 : vector<8x8xf32> to vector<8x8xbf16>
    %c16 = arith.constant 16 : index
    %c0_23 = arith.constant 0 : index
    %77 = vector.load %arg4[%c16, %c0_23] : memref<32x32xbf16, #tpu.memory_space<vmem>>, vector<8x32xbf16>
    %cst_24 = arith.constant dense<0.000000e+00> : vector<8x32xf32>
    %78 = tpu.matmul %76, %77, %cst_24 {dimension_numbers = #tpu.dot_dimension_numbers<[1], [0], [0], [1], [0, 0, 1, 1], [], []>} : vector<8x8xbf16>, vector<8x32xbf16>, vector<8x32xf32> -> vector<8x32xf32>
    %79 = arith.addf %56, %78 : vector<8x32xf32>
    %80 = vector.extract_strided_slice %7 {offsets = [0, 24], sizes = [8, 8], strides = [1, 1]} : vector<8x32xf32> to vector<8x8xf32>
    %81 = arith.truncf %80 : vector<8x8xf32> to vector<8x8xbf16>
    %82 = vector.extract_strided_slice %8 {offsets = [0, 24], sizes = [8, 8], strides = [1, 1]} : vector<8x32xf32> to vector<8x8xf32>
    %83 = arith.truncf %82 : vector<8x8xf32> to vector<8x8xbf16>
    %84 = vector.extract_strided_slice %9 {offsets = [0, 24], sizes = [8, 8], strides = [1, 1]} : vector<8x32xf32> to vector<8x8xf32>
    %85 = arith.truncf %84 : vector<8x8xf32> to vector<8x8xbf16>
    %cst_25 = arith.constant dense<0.000000e+00> : vector<8x8xf32>
    %86 = tpu.matmul %81, %83, %cst_25 {dimension_numbers = #tpu.dot_dimension_numbers<[1], [1], [0], [0], [0, 0, 1, 0], [], []>} : vector<8x8xbf16>, vector<8x8xbf16>, vector<8x8xf32> -> vector<8x8xf32>
    %cst_26 = arith.constant dense<0xFF800000> : vector<8xf32>
    %87 = vector.multi_reduction <maximumf>, %86, %cst_26 [1] : vector<8x8xf32> to vector<8xf32>
    %88 = vector.shape_cast %87 : vector<8xf32> to vector<8x1xf32>
    %89 = vector.broadcast %88 : vector<8x1xf32> to vector<8x8xf32>
    %90 = arith.subf %86, %89 : vector<8x8xf32>
    %91 = math.exp %90 : vector<8x8xf32>
    %cst_27 = arith.constant dense<0.000000e+00> : vector<8xf32>
    %92 = vector.multi_reduction <add>, %91, %cst_27 [1] : vector<8x8xf32> to vector<8xf32>
    %93 = vector.shape_cast %92 : vector<8xf32> to vector<8x1xf32>
    %94 = tpu.reciprocal %93 {approx = true} : vector<8x1xf32> -> vector<8x1xf32>
    %95 = vector.broadcast %94 : vector<8x1xf32> to vector<8x8xf32>
    %96 = arith.mulf %91, %95 : vector<8x8xf32>
    %97 = arith.truncf %96 : vector<8x8xf32> to vector<8x8xbf16>
    %cst_28 = arith.constant dense<0.000000e+00> : vector<8x8xf32>
    %98 = tpu.matmul %97, %85, %cst_28 {dimension_numbers = #tpu.dot_dimension_numbers<[1], [0], [0], [1], [0, 0, 1, 1], [], []>} : vector<8x8xbf16>, vector<8x8xbf16>, vector<8x8xf32> -> vector<8x8xf32>
    %99 = arith.truncf %98 : vector<8x8xf32> to vector<8x8xbf16>
    %c24 = arith.constant 24 : index
    %c0_29 = arith.constant 0 : index
    %100 = vector.load %arg4[%c24, %c0_29] : memref<32x32xbf16, #tpu.memory_space<vmem>>, vector<8x32xbf16>
    %cst_30 = arith.constant dense<0.000000e+00> : vector<8x32xf32>
    %101 = tpu.matmul %99, %100, %cst_30 {dimension_numbers = #tpu.dot_dimension_numbers<[1], [0], [0], [1], [0, 0, 1, 1], [], []>} : vector<8x8xbf16>, vector<8x32xbf16>, vector<8x32xf32> -> vector<8x32xf32>
    %102 = arith.addf %79, %101 : vector<8x32xf32>
    %c0_31 = arith.constant 0 : index
    %c0_32 = arith.constant 0 : index
    %103 = vector.load %arg5[%c0_31, %c0_32] : memref<1x32xf32, #tpu.memory_space<vmem>>, vector<1x32xf32>
    %104 = vector.broadcast %103 : vector<1x32xf32> to vector<8x32xf32>
    %105 = arith.addf %102, %104 : vector<8x32xf32>
    %c0_33 = arith.constant 0 : index
    %c0_34 = arith.constant 0 : index
    %106 = vector.load %arg15[%c0_33, %c0_34] : memref<16x32xf32, #tpu.memory_space<vmem>>, vector<8x32xf32>
    tpu.vector_store %arg15[%c0_33, %c0_34], %105 {strides = array<i32>} : memref<16x32xf32, #tpu.memory_space<vmem>>, vector<8x32xf32>,
    %107 = vector.extract_strided_slice %6 {offsets = [8, 0], sizes = [8, 32], strides = [1, 1]} : vector<16x96xf32> to vector<8x32xf32>
    %108 = vector.extract_strided_slice %6 {offsets = [8, 32], sizes = [8, 32], strides = [1, 1]} : vector<16x96xf32> to vector<8x32xf32>
    %109 = vector.extract_strided_slice %6 {offsets = [8, 64], sizes = [8, 32], strides = [1, 1]} : vector<16x96xf32> to vector<8x32xf32>
    %cst_35 = arith.constant 0.000000e+00 : f32
    %110 = vector.broadcast %cst_35 : f32 to vector<8x32xf32>
    %111 = vector.extract_strided_slice %107 {offsets = [0, 0], sizes = [8, 8], strides = [1, 1]} : vector<8x32xf32> to vector<8x8xf32>
    %112 = arith.truncf %111 : vector<8x8xf32> to vector<8x8xbf16>
    %113 = vector.extract_strided_slice %108 {offsets = [0, 0], sizes = [8, 8], strides = [1, 1]} : vector<8x32xf32> to vector<8x8xf32>
    %114 = arith.truncf %113 : vector<8x8xf32> to vector<8x8xbf16>
    %115 = vector.extract_strided_slice %109 {offsets = [0, 0], sizes = [8, 8], strides = [1, 1]} : vector<8x32xf32> to vector<8x8xf32>
    %116 = arith.truncf %115 : vector<8x8xf32> to vector<8x8xbf16>
    %cst_36 = arith.constant dense<0.000000e+00> : vector<8x8xf32>
    %117 = tpu.matmul %112, %114, %cst_36 {dimension_numbers = #tpu.dot_dimension_numbers<[1], [1], [0], [0], [0, 0, 1, 0], [], []>} : vector<8x8xbf16>, vector<8x8xbf16>, vector<8x8xf32> -> vector<8x8xf32>
    %cst_37 = arith.constant dense<0xFF800000> : vector<8xf32>
    %118 = vector.multi_reduction <maximumf>, %117, %cst_37 [1] : vector<8x8xf32> to vector<8xf32>
    %119 = vector.shape_cast %118 : vector<8xf32> to vector<8x1xf32>
    %120 = vector.broadcast %119 : vector<8x1xf32> to vector<8x8xf32>
    %121 = arith.subf %117, %120 : vector<8x8xf32>
    %122 = math.exp %121 : vector<8x8xf32>
    %cst_38 = arith.constant dense<0.000000e+00> : vector<8xf32>
    %123 = vector.multi_reduction <add>, %122, %cst_38 [1] : vector<8x8xf32> to vector<8xf32>
    %124 = vector.shape_cast %123 : vector<8xf32> to vector<8x1xf32>
    %125 = tpu.reciprocal %124 {approx = true} : vector<8x1xf32> -> vector<8x1xf32>
    %126 = vector.broadcast %125 : vector<8x1xf32> to vector<8x8xf32>
    %127 = arith.mulf %122, %126 : vector<8x8xf32>
    %128 = arith.truncf %127 : vector<8x8xf32> to vector<8x8xbf16>
    %cst_39 = arith.constant dense<0.000000e+00> : vector<8x8xf32>
    %129 = tpu.matmul %128, %116, %cst_39 {dimension_numbers = #tpu.dot_dimension_numbers<[1], [0], [0], [1], [0, 0, 1, 1], [], []>} : vector<8x8xbf16>, vector<8x8xbf16>, vector<8x8xf32> -> vector<8x8xf32>
    %130 = arith.truncf %129 : vector<8x8xf32> to vector<8x8xbf16>
    %c0_40 = arith.constant 0 : index
    %c0_41 = arith.constant 0 : index
    %131 = vector.load %arg4[%c0_40, %c0_41] : memref<32x32xbf16, #tpu.memory_space<vmem>>, vector<8x32xbf16>
    %cst_42 = arith.constant dense<0.000000e+00> : vector<8x32xf32>
    %132 = tpu.matmul %130, %131, %cst_42 {dimension_numbers = #tpu.dot_dimension_numbers<[1], [0], [0], [1], [0, 0, 1, 1], [], []>} : vector<8x8xbf16>, vector<8x32xbf16>, vector<8x32xf32> -> vector<8x32xf32>
    %133 = arith.addf %110, %132 : vector<8x32xf32>
    %134 = vector.extract_strided_slice %107 {offsets = [0, 8], sizes = [8, 8], strides = [1, 1]} : vector<8x32xf32> to vector<8x8xf32>
    %135 = arith.truncf %134 : vector<8x8xf32> to vector<8x8xbf16>
    %136 = vector.extract_strided_slice %108 {offsets = [0, 8], sizes = [8, 8], strides = [1, 1]} : vector<8x32xf32> to vector<8x8xf32>
    %137 = arith.truncf %136 : vector<8x8xf32> to vector<8x8xbf16>
    %138 = vector.extract_strided_slice %109 {offsets = [0, 8], sizes = [8, 8], strides = [1, 1]} : vector<8x32xf32> to vector<8x8xf32>
    %139 = arith.truncf %138 : vector<8x8xf32> to vector<8x8xbf16>
    %cst_43 = arith.constant dense<0.000000e+00> : vector<8x8xf32>
    %140 = tpu.matmul %135, %137, %cst_43 {dimension_numbers = #tpu.dot_dimension_numbers<[1], [1], [0], [0], [0, 0, 1, 0], [], []>} : vector<8x8xbf16>, vector<8x8xbf16>, vector<8x8xf32> -> vector<8x8xf32>
    %cst_44 = arith.constant dense<0xFF800000> : vector<8xf32>
    %141 = vector.multi_reduction <maximumf>, %140, %cst_44 [1] : vector<8x8xf32> to vector<8xf32>
    %142 = vector.shape_cast %141 : vector<8xf32> to vector<8x1xf32>
    %143 = vector.broadcast %142 : vector<8x1xf32> to vector<8x8xf32>
    %144 = arith.subf %140, %143 : vector<8x8xf32>
    %145 = math.exp %144 : vector<8x8xf32>
    %cst_45 = arith.constant dense<0.000000e+00> : vector<8xf32>
    %146 = vector.multi_reduction <add>, %145, %cst_45 [1] : vector<8x8xf32> to vector<8xf32>
    %147 = vector.shape_cast %146 : vector<8xf32> to vector<8x1xf32>
    %148 = tpu.reciprocal %147 {approx = true} : vector<8x1xf32> -> vector<8x1xf32>
    %149 = vector.broadcast %148 : vector<8x1xf32> to vector<8x8xf32>
    %150 = arith.mulf %145, %149 : vector<8x8xf32>
    %151 = arith.truncf %150 : vector<8x8xf32> to vector<8x8xbf16>
    %cst_46 = arith.constant dense<0.000000e+00> : vector<8x8xf32>
    %152 = tpu.matmul %151, %139, %cst_46 {dimension_numbers = #tpu.dot_dimension_numbers<[1], [0], [0], [1], [0, 0, 1, 1], [], []>} : vector<8x8xbf16>, vector<8x8xbf16>, vector<8x8xf32> -> vector<8x8xf32>
    %153 = arith.truncf %152 : vector<8x8xf32> to vector<8x8xbf16>
    %c8_47 = arith.constant 8 : index
    %c0_48 = arith.constant 0 : index
    %154 = vector.load %arg4[%c8_47, %c0_48] : memref<32x32xbf16, #tpu.memory_space<vmem>>, vector<8x32xbf16>
    %cst_49 = arith.constant dense<0.000000e+00> : vector<8x32xf32>
    %155 = tpu.matmul %153, %154, %cst_49 {dimension_numbers = #tpu.dot_dimension_numbers<[1], [0], [0], [1], [0, 0, 1, 1], [], []>} : vector<8x8xbf16>, vector<8x32xbf16>, vector<8x32xf32> -> vector<8x32xf32>
    %156 = arith.addf %133, %155 : vector<8x32xf32>
    %157 = vector.extract_strided_slice %107 {offsets = [0, 16], sizes = [8, 8], strides = [1, 1]} : vector<8x32xf32> to vector<8x8xf32>
    %158 = arith.truncf %157 : vector<8x8xf32> to vector<8x8xbf16>
    %159 = vector.extract_strided_slice %108 {offsets = [0, 16], sizes = [8, 8], strides = [1, 1]} : vector<8x32xf32> to vector<8x8xf32>
    %160 = arith.truncf %159 : vector<8x8xf32> to vector<8x8xbf16>
    %161 = vector.extract_strided_slice %109 {offsets = [0, 16], sizes = [8, 8], strides = [1, 1]} : vector<8x32xf32> to vector<8x8xf32>
    %162 = arith.truncf %161 : vector<8x8xf32> to vector<8x8xbf16>
    %cst_50 = arith.constant dense<0.000000e+00> : vector<8x8xf32>
    %163 = tpu.matmul %158, %160, %cst_50 {dimension_numbers = #tpu.dot_dimension_numbers<[1], [1], [0], [0], [0, 0, 1, 0], [], []>} : vector<8x8xbf16>, vector<8x8xbf16>, vector<8x8xf32> -> vector<8x8xf32>
    %cst_51 = arith.constant dense<0xFF800000> : vector<8xf32>
    %164 = vector.multi_reduction <maximumf>, %163, %cst_51 [1] : vector<8x8xf32> to vector<8xf32>
    %165 = vector.shape_cast %164 : vector<8xf32> to vector<8x1xf32>
    %166 = vector.broadcast %165 : vector<8x1xf32> to vector<8x8xf32>
    %167 = arith.subf %163, %166 : vector<8x8xf32>
    %168 = math.exp %167 : vector<8x8xf32>
    %cst_52 = arith.constant dense<0.000000e+00> : vector<8xf32>
    %169 = vector.multi_reduction <add>, %168, %cst_52 [1] : vector<8x8xf32> to vector<8xf32>
    %170 = vector.shape_cast %169 : vector<8xf32> to vector<8x1xf32>
    %171 = tpu.reciprocal %170 {approx = true} : vector<8x1xf32> -> vector<8x1xf32>
    %172 = vector.broadcast %171 : vector<8x1xf32> to vector<8x8xf32>
    %173 = arith.mulf %168, %172 : vector<8x8xf32>
    %174 = arith.truncf %173 : vector<8x8xf32> to vector<8x8xbf16>
    %cst_53 = arith.constant dense<0.000000e+00> : vector<8x8xf32>
    %175 = tpu.matmul %174, %162, %cst_53 {dimension_numbers = #tpu.dot_dimension_numbers<[1], [0], [0], [1], [0, 0, 1, 1], [], []>} : vector<8x8xbf16>, vector<8x8xbf16>, vector<8x8xf32> -> vector<8x8xf32>
    %176 = arith.truncf %175 : vector<8x8xf32> to vector<8x8xbf16>
    %c16_54 = arith.constant 16 : index
    %c0_55 = arith.constant 0 : index
    %177 = vector.load %arg4[%c16_54, %c0_55] : memref<32x32xbf16, #tpu.memory_space<vmem>>, vector<8x32xbf16>
    %cst_56 = arith.constant dense<0.000000e+00> : vector<8x32xf32>
    %178 = tpu.matmul %176, %177, %cst_56 {dimension_numbers = #tpu.dot_dimension_numbers<[1], [0], [0], [1], [0, 0, 1, 1], [], []>} : vector<8x8xbf16>, vector<8x32xbf16>, vector<8x32xf32> -> vector<8x32xf32>
    %179 = arith.addf %156, %178 : vector<8x32xf32>
    %180 = vector.extract_strided_slice %107 {offsets = [0, 24], sizes = [8, 8], strides = [1, 1]} : vector<8x32xf32> to vector<8x8xf32>
    %181 = arith.truncf %180 : vector<8x8xf32> to vector<8x8xbf16>
    %182 = vector.extract_strided_slice %108 {offsets = [0, 24], sizes = [8, 8], strides = [1, 1]} : vector<8x32xf32> to vector<8x8xf32>
    %183 = arith.truncf %182 : vector<8x8xf32> to vector<8x8xbf16>
    %184 = vector.extract_strided_slice %109 {offsets = [0, 24], sizes = [8, 8], strides = [1, 1]} : vector<8x32xf32> to vector<8x8xf32>
    %185 = arith.truncf %184 : vector<8x8xf32> to vector<8x8xbf16>
    %cst_57 = arith.constant dense<0.000000e+00> : vector<8x8xf32>
    %186 = tpu.matmul %181, %183, %cst_57 {dimension_numbers = #tpu.dot_dimension_numbers<[1], [1], [0], [0], [0, 0, 1, 0], [], []>} : vector<8x8xbf16>, vector<8x8xbf16>, vector<8x8xf32> -> vector<8x8xf32>
    %cst_58 = arith.constant dense<0xFF800000> : vector<8xf32>
    %187 = vector.multi_reduction <maximumf>, %186, %cst_58 [1] : vector<8x8xf32> to vector<8xf32>
    %188 = vector.shape_cast %187 : vector<8xf32> to vector<8x1xf32>
    %189 = vector.broadcast %188 : vector<8x1xf32> to vector<8x8xf32>
    %190 = arith.subf %186, %189 : vector<8x8xf32>
    %191 = math.exp %190 : vector<8x8xf32>
    %cst_59 = arith.constant dense<0.000000e+00> : vector<8xf32>
    %192 = vector.multi_reduction <add>, %191, %cst_59 [1] : vector<8x8xf32> to vector<8xf32>
    %193 = vector.shape_cast %192 : vector<8xf32> to vector<8x1xf32>
    %194 = tpu.reciprocal %193 {approx = true} : vector<8x1xf32> -> vector<8x1xf32>
    %195 = vector.broadcast %194 : vector<8x1xf32> to vector<8x8xf32>
    %196 = arith.mulf %191, %195 : vector<8x8xf32>
    %197 = arith.truncf %196 : vector<8x8xf32> to vector<8x8xbf16>
    %cst_60 = arith.constant dense<0.000000e+00> : vector<8x8xf32>
    %198 = tpu.matmul %197, %185, %cst_60 {dimension_numbers = #tpu.dot_dimension_numbers<[1], [0], [0], [1], [0, 0, 1, 1], [], []>} : vector<8x8xbf16>, vector<8x8xbf16>, vector<8x8xf32> -> vector<8x8xf32>
    %199 = arith.truncf %198 : vector<8x8xf32> to vector<8x8xbf16>
    %c24_61 = arith.constant 24 : index
    %c0_62 = arith.constant 0 : index
    %200 = vector.load %arg4[%c24_61, %c0_62] : memref<32x32xbf16, #tpu.memory_space<vmem>>, vector<8x32xbf16>
    %cst_63 = arith.constant dense<0.000000e+00> : vector<8x32xf32>
    %201 = tpu.matmul %199, %200, %cst_63 {dimension_numbers = #tpu.dot_dimension_numbers<[1], [0], [0], [1], [0, 0, 1, 1], [], []>} : vector<8x8xbf16>, vector<8x32xbf16>, vector<8x32xf32> -> vector<8x32xf32>
    %202 = arith.addf %179, %201 : vector<8x32xf32>
    %c0_64 = arith.constant 0 : index
    %c0_65 = arith.constant 0 : index
    %203 = vector.load %arg5[%c0_64, %c0_65] : memref<1x32xf32, #tpu.memory_space<vmem>>, vector<1x32xf32>
    %204 = vector.broadcast %203 : vector<1x32xf32> to vector<8x32xf32>
    %205 = arith.addf %202, %204 : vector<8x32xf32>
    %c8_66 = arith.constant 8 : index
    %c0_67 = arith.constant 0 : index
    %206 = vector.load %arg15[%c8_66, %c0_67] : memref<16x32xf32, #tpu.memory_space<vmem>>, vector<8x32xf32>
    tpu.vector_store %arg15[%c8_66, %c0_67], %205 {strides = array<i32>} : memref<16x32xf32, #tpu.memory_space<vmem>>, vector<8x32xf32>,
    %c0_68 = arith.constant 0 : index
    %c0_69 = arith.constant 0 : index
    %207 = vector.load %arg15[%c0_68, %c0_69] : memref<16x32xf32, #tpu.memory_space<vmem>>, vector<16x32xf32>
    %208 = arith.addf %0, %207 : vector<16x32xf32>
    %c0_70 = arith.constant 0 : index
    %c0_71 = arith.constant 0 : index
    %209 = vector.load %arg6[%c0_70, %c0_71] : memref<1x32xf32, #tpu.memory_space<vmem>>, vector<1x32xf32>
    %c0_72 = arith.constant 0 : index
    %c0_73 = arith.constant 0 : index
    %210 = vector.load %arg7[%c0_72, %c0_73] : memref<1x32xf32, #tpu.memory_space<vmem>>, vector<1x32xf32>
    %cst_74 = arith.constant dense<0.000000e+00> : vector<16xf32>
    %211 = vector.multi_reduction <add>, %208, %cst_74 [1] : vector<16x32xf32> to vector<16xf32>
    %212 = vector.shape_cast %211 : vector<16xf32> to vector<16x1xf32>
    %cst_75 = arith.constant 3.200000e+01 : f32
    %213 = vector.broadcast %cst_75 : f32 to vector<16x1xf32>
    %214 = arith.divf %212, %213 : vector<16x1xf32>
    %215 = vector.broadcast %214 : vector<16x1xf32> to vector<16x32xf32>
    %216 = arith.subf %208, %215 : vector<16x32xf32>
    %217 = vector.broadcast %214 : vector<16x1xf32> to vector<16x32xf32>
    %218 = arith.subf %208, %217 : vector<16x32xf32>
    %219 = arith.mulf %216, %218 : vector<16x32xf32>
    %cst_76 = arith.constant dense<0.000000e+00> : vector<16xf32>
    %220 = vector.multi_reduction <add>, %219, %cst_76 [1] : vector<16x32xf32> to vector<16xf32>
    %221 = vector.shape_cast %220 : vector<16xf32> to vector<16x1xf32>
    %cst_77 = arith.constant 3.200000e+01 : f32
    %222 = vector.broadcast %cst_77 : f32 to vector<16x1xf32>
    %223 = arith.divf %221, %222 : vector<16x1xf32>
    %224 = vector.broadcast %214 : vector<16x1xf32> to vector<16x32xf32>
    %225 = arith.subf %208, %224 : vector<16x32xf32>
    %cst_78 = arith.constant 9.99999974E-6 : f32
    %226 = vector.broadcast %cst_78 : f32 to vector<16x1xf32>
    %227 = arith.addf %223, %226 : vector<16x1xf32>
    %228 = math.rsqrt %227 : vector<16x1xf32>
    %229 = vector.broadcast %228 : vector<16x1xf32> to vector<16x32xf32>
    %230 = arith.mulf %225, %229 : vector<16x32xf32>
    %231 = vector.broadcast %209 : vector<1x32xf32> to vector<16x32xf32>
    %232 = arith.mulf %230, %231 : vector<16x32xf32>
    %233 = vector.broadcast %210 : vector<1x32xf32> to vector<16x32xf32>
    %234 = arith.addf %232, %233 : vector<16x32xf32>
    %235 = arith.truncf %234 : vector<16x32xf32> to vector<16x32xbf16>
    %c0_79 = arith.constant 0 : index
    %c0_80 = arith.constant 0 : index
    %236 = vector.load %arg8[%c0_79, %c0_80] : memref<32x64xbf16, #tpu.memory_space<vmem>>, vector<32x64xbf16>
    %cst_81 = arith.constant dense<0.000000e+00> : vector<16x64xf32>
    %237 = tpu.matmul %235, %236, %cst_81 {dimension_numbers = #tpu.dot_dimension_numbers<[1], [0], [0], [1], [0, 0, 1, 1], [], []>} : vector<16x32xbf16>, vector<32x64xbf16>, vector<16x64xf32> -> vector<16x64xf32>
    %c0_82 = arith.constant 0 : index
    %c0_83 = arith.constant 0 : index
    %238 = vector.load %arg9[%c0_82, %c0_83] : memref<1x64xf32, #tpu.memory_space<vmem>>, vector<1x64xf32>
    %239 = vector.broadcast %238 : vector<1x64xf32> to vector<16x64xf32>
    %240 = arith.addf %237, %239 : vector<16x64xf32>
    %cst_84 = arith.constant 0.000000e+00 : f32
    %241 = vector.broadcast %cst_84 : f32 to vector<16x64xf32>
    %242 = arith.maximumf %240, %241 : vector<16x64xf32>
    %243 = arith.truncf %242 : vector<16x64xf32> to vector<16x64xbf16>
    %c0_85 = arith.constant 0 : index
    %c0_86 = arith.constant 0 : index
    %244 = vector.load %arg10[%c0_85, %c0_86] : memref<64x32xbf16, #tpu.memory_space<vmem>>, vector<64x32xbf16>
    %cst_87 = arith.constant dense<0.000000e+00> : vector<16x32xf32>
    %245 = tpu.matmul %243, %244, %cst_87 {dimension_numbers = #tpu.dot_dimension_numbers<[1], [0], [0], [1], [0, 0, 1, 1], [], []>} : vector<16x64xbf16>, vector<64x32xbf16>, vector<16x32xf32> -> vector<16x32xf32>
    %c0_88 = arith.constant 0 : index
    %c0_89 = arith.constant 0 : index
    %246 = vector.load %arg11[%c0_88, %c0_89] : memref<1x32xf32, #tpu.memory_space<vmem>>, vector<1x32xf32>
    %247 = vector.broadcast %246 : vector<1x32xf32> to vector<16x32xf32>
    %248 = arith.addf %245, %247 : vector<16x32xf32>
    %249 = arith.addf %234, %248 : vector<16x32xf32>
    %c0_90 = arith.constant 0 : index
    %c0_91 = arith.constant 0 : index
    %250 = vector.load %arg12[%c0_90, %c0_91] : memref<1x32xf32, #tpu.memory_space<vmem>>, vector<1x32xf32>
    %c0_92 = arith.constant 0 : index
    %c0_93 = arith.constant 0 : index
    %251 = vector.load %arg13[%c0_92, %c0_93] : memref<1x32xf32, #tpu.memory_space<vmem>>, vector<1x32xf32>
    %cst_94 = arith.constant dense<0.000000e+00> : vector<16xf32>
    %252 = vector.multi_reduction <add>, %249, %cst_94 [1] : vector<16x32xf32> to vector<16xf32>
    %253 = vector.shape_cast %252 : vector<16xf32> to vector<16x1xf32>
    %cst_95 = arith.constant 3.200000e+01 : f32
    %254 = vector.broadcast %cst_95 : f32 to vector<16x1xf32>
    %255 = arith.divf %253, %254 : vector<16x1xf32>
    %256 = vector.broadcast %255 : vector<16x1xf32> to vector<16x32xf32>
    %257 = arith.subf %249, %256 : vector<16x32xf32>
    %258 = vector.broadcast %255 : vector<16x1xf32> to vector<16x32xf32>
    %259 = arith.subf %249, %258 : vector<16x32xf32>
    %260 = arith.mulf %257, %259 : vector<16x32xf32>
    %cst_96 = arith.constant dense<0.000000e+00> : vector<16xf32>
    %261 = vector.multi_reduction <add>, %260, %cst_96 [1] : vector<16x32xf32> to vector<16xf32>
    %262 = vector.shape_cast %261 : vector<16xf32> to vector<16x1xf32>
    %cst_97 = arith.constant 3.200000e+01 : f32
    %263 = vector.broadcast %cst_97 : f32 to vector<16x1xf32>
    %264 = arith.divf %262, %263 : vector<16x1xf32>
    %265 = vector.broadcast %255 : vector<16x1xf32> to vector<16x32xf32>
    %266 = arith.subf %249, %265 : vector<16x32xf32>
    %cst_98 = arith.constant 9.99999974E-6 : f32
    %267 = vector.broadcast %cst_98 : f32 to vector<16x1xf32>
    %268 = arith.addf %264, %267 : vector<16x1xf32>
    %269 = math.rsqrt %268 : vector<16x1xf32>
    %270 = vector.broadcast %269 : vector<16x1xf32> to vector<16x32xf32>
    %271 = arith.mulf %266, %270 : vector<16x32xf32>
    %272 = vector.broadcast %250 : vector<1x32xf32> to vector<16x32xf32>
    %273 = arith.mulf %271, %272 : vector<16x32xf32>
    %274 = vector.broadcast %251 : vector<1x32xf32> to vector<16x32xf32>
    %275 = arith.addf %273, %274 : vector<16x32xf32>
    %c0_99 = arith.constant 0 : index
    %c0_100 = arith.constant 0 : index
    %276 = vector.load %arg14[%c0_99, %c0_100] : memref<16x32xf32, #tpu.memory_space<vmem>>, vector<16x32xf32>
    tpu.vector_store %arg14[%c0_99, %c0_100], %275 {strides = array<i32>} : memref<16x32xf32, #tpu.memory_space<vmem>>, vector<16x32xf32>,
    return
  }
  func.func @transform_0(%arg0: i32) -> (i32, i32) {
    %c0_i32 = arith.constant 0 : i32
    %c0_i32_0 = arith.constant 0 : i32
    return %arg0, %c0_i32 : i32, i32
  }
  func.func @transform_1(%arg0: i32) -> (i32, i32) {
    %c0_i32 = arith.constant 0 : i32
    %c0_i32_0 = arith.constant 0 : i32
    %c0_i32_1 = arith.constant 0 : i32
    return %c0_i32, %c0_i32_0 : i32, i32
  }
  func.func @transform_2(%arg0: i32) -> (i32, i32) {
    %c0_i32 = arith.constant 0 : i32
    %c0_i32_0 = arith.constant 0 : i32
    %c0_i32_1 = arith.constant 0 : i32
    return %c0_i32, %c0_i32_0 : i32, i32
  }
  func.func @transform_3(%arg0: i32) -> (i32, i32) {
    %c0_i32 = arith.constant 0 : i32
    %c0_i32_0 = arith.constant 0 : i32
    %c0_i32_1 = arith.constant 0 : i32
    return %c0_i32, %c0_i32_0 : i32, i32
  }
  func.func @transform_4(%arg0: i32) -> (i32, i32) {
    %c0_i32 = arith.constant 0 : i32
    %c0_i32_0 = arith.constant 0 : i32
    %c0_i32_1 = arith.constant 0 : i32
    return %c0_i32, %c0_i32_0 : i32, i32
  }
  func.func @transform_5(%arg0: i32) -> (i32, i32) {
    %c0_i32 = arith.constant 0 : i32
    %c0_i32_0 = arith.constant 0 : i32
    %c0_i32_1 = arith.constant 0 : i32
    return %c0_i32, %c0_i32_0 : i32, i32
  }
  func.func @transform_6(%arg0: i32) -> (i32, i32) {
    %c0_i32 = arith.constant 0 : i32
    %c0_i32_0 = arith.constant 0 : i32
    %c0_i32_1 = arith.constant 0 : i32
    return %c0_i32, %c0_i32_0 : i32, i32
  }
  func.func @transform_7(%arg0: i32) -> (i32, i32) {
    %c0_i32 = arith.constant 0 : i32
    %c0_i32_0 = arith.constant 0 : i32
    %c0_i32_1 = arith.constant 0 : i32
    return %c0_i32, %c0_i32_0 : i32, i32
  }
  func.func @transform_8(%arg0: i32) -> (i32, i32) {
    %c0_i32 = arith.constant 0 : i32
    %c0_i32_0 = arith.constant 0 : i32
    %c0_i32_1 = arith.constant 0 : i32
    return %c0_i32, %c0_i32_0 : i32, i32
  }
  func.func @transform_9(%arg0: i32) -> (i32, i32) {
    %c0_i32 = arith.constant 0 : i32
    %c0_i32_0 = arith.constant 0 : i32
    %c0_i32_1 = arith.constant 0 : i32
    return %c0_i32, %c0_i32_0 : i32, i32
  }
  func.func @transform_10(%arg0: i32) -> (i32, i32) {
    %c0_i32 = arith.constant 0 : i32
    %c0_i32_0 = arith.constant 0 : i32
    %c0_i32_1 = arith.constant 0 : i32
    return %c0_i32, %c0_i32_0 : i32, i32
  }
  func.func @transform_11(%arg0: i32) -> (i32, i32) {
    %c0_i32 = arith.constant 0 : i32
    %c0_i32_0 = arith.constant 0 : i32
    %c0_i32_1 = arith.constant 0 : i32
    return %c0_i32, %c0_i32_0 : i32, i32
  }
  func.func @transform_12(%arg0: i32) -> (i32, i32) {
    %c0_i32 = arith.constant 0 : i32
    %c0_i32_0 = arith.constant 0 : i32
    %c0_i32_1 = arith.constant 0 : i32
    return %c0_i32, %c0_i32_0 : i32, i32
  }
  func.func @transform_13(%arg0: i32) -> (i32, i32) {
    %c0_i32 = arith.constant 0 : i32
    %c0_i32_0 = arith.constant 0 : i32
    return %arg0, %c0_i32 : i32, i32
  }
}

</mosaic_0001>

<llo_original>
// kernel: tpu_custom_call.1
$region0: #{tpu_custom_call.1}
  #allocation0 [shape = 'u32[]', space=smem, size = 0x4, offset = 0x4, fixed_abs, tag = 'smem constant byte address 0x4 - core index']
  #allocation1 [shape = 'u32[72,128]{1,0:T(1,128)}', space=vmem, size = 0x9000, scoped, tag = 'internal scratch']
  %s0 = inlined_call_operand.hbm [shape: f32[8,128], index: 0, kind: input, shape index: {}]
  %s1 = inlined_call_operand.hbm [shape: f32[8,128], index: 1, kind: input, shape index: {}]
  %s2 = inlined_call_operand.hbm [shape: f32[8,128], index: 2, kind: output, shape index: {}]
  %s3 = sld [smem:[#allocation0]]
  $region49: #{tpu_custom_call.1} parent=0
    _
  %s5 = ssub.s32 1, %s3
  %s6 = scalar_select 0, %s5, %s3
  $region1: #{tpu_custom_call.1} parent=0
    #allocation2 [shape = 'u8[4096]{0}', space=vmem, size = 0x1000, scoped, tag = 'input window, operand 0, single buffered']
    #allocation3 [shape = 's32[2]{0}', space=sflag, size = 0x8, scoped, tag = 'scoped memory for tpu_custom_call.1']
    #allocation4 [shape = 's32[2]{0}', space=sflag, size = 0x8, scoped, tag = 'scoped memory for tpu_custom_call.1']
    #allocation5 [shape = 'u8[4096]{0}', space=vmem, size = 0x1000, scoped, tag = 'input window, operand 1, single buffered']
    #allocation6 [shape = 's32[1]{0}', space=sflag, size = 0x4, scoped, tag = 'scoped memory for tpu_custom_call.1']
    #allocation7 [shape = 'u8[4096]{0}', space=vmem, size = 0x1000, scoped, tag = 'output window, operand 0, single buffered']
    %7 = vsyncpa [#allocation3], 0
    %8 = vsyncpa [#allocation6], 0
    %9 = vsyncpa [#allocation4], 0
    loop: start=0, step=1, limit=4
    $region2: #{tpu_custom_call.1} parent=1 // loop_pre_header
      _
    $region3: #{tpu_custom_call.1} parent=1 // loop_header
      %s11 = sphi 0, %s15
      %p12 = scmp.ge.s32.totalorder %s11, 4
      %s19 = sphi 0, %s19
      %s21 = sphi 0, %s19
      %s22 = sphi 0, %s21
      %s36 = sphi 0, %s22
      %s40 = sphi 0, %s40
      %s42 = sphi 0, %s40
      %s43 = sphi 0, %s42
      %s57 = sphi 0, %s43
      %s61 = sphi 0, %s61
      %s63 = sphi 0, %s61
      %s64 = sphi 0, %s63
      %s78 = sphi 0, %s64
    $region4: #{tpu_custom_call.1} parent=1 // loop_header_branch
      %14 = sbr.rel (%p12) target = $region8
    $region5: #{tpu_custom_call.1} parent=1 // loop_body
      %s16 = ssub.s32 %s11, 1
      %s17 = ssub.s32 %s11, 2
      %s18 = sadd.s32 %s11, 1
      %s20 = sadd.s32 %s19, 1
      %p23 = scmp.eq.s32.totalorder %s11, 1
      %p24 = scmp.ne.s32.totalorder %s19, %s21
      %p25 = scmp.eq.s32.totalorder %s11, 0
      %p26 = por %p24, %p25
      %p27 = scmp.ne.s32.totalorder %s19, %s21
      %p28 = scmp.eq.s32.totalorder %s16, 1
      %p29 = por %p27, %p28
      %p30 = scmp.ne.s32.totalorder %s21, %s22
      %p31 = scmp.eq.s32.totalorder %s16, 0
      %p32 = por %p30, %p31
      %p33 = scmp.ne.s32.totalorder %s21, %s22
      %p34 = scmp.eq.s32.totalorder %s17, 1
      %p35 = por %p33, %p34
      %p37 = scmp.ne.s32.totalorder %s22, %s36
      %p38 = scmp.eq.s32.totalorder %s17, 0
      %p39 = por %p37, %p38
      %s41 = sadd.s32 %s40, 1
      %p44 = scmp.eq.s32.totalorder %s11, 1
      %p45 = scmp.ne.s32.totalorder %s40, %s42
      %p46 = scmp.eq.s32.totalorder %s11, 0
      %p47 = por %p45, %p46
      %p48 = scmp.ne.s32.totalorder %s40, %s42
      %p49 = scmp.eq.s32.totalorder %s16, 1
      %p50 = por %p48, %p49
      %p51 = scmp.ne.s32.totalorder %s42, %s43
      %p52 = scmp.eq.s32.totalorder %s16, 0
      %p53 = por %p51, %p52
      %p54 = scmp.ne.s32.totalorder %s42, %s43
      %p55 = scmp.eq.s32.totalorder %s17, 1
      %p56 = por %p54, %p55
      %p58 = scmp.ne.s32.totalorder %s43, %s57
      %p59 = scmp.eq.s32.totalorder %s17, 0
      %p60 = por %p58, %p59
      %s62 = sadd.s32 %s61, 1
      %p65 = scmp.eq.s32.totalorder %s11, 1
      %p66 = scmp.ne.s32.totalorder %s61, %s63
      %p67 = scmp.eq.s32.totalorder %s11, 0
      %p68 = por %p66, %p67
      %p69 = scmp.ne.s32.totalorder %s61, %s63
      %p70 = scmp.eq.s32.totalorder %s16, 1
      %p71 = por %p69, %p70
      %p72 = scmp.ne.s32.totalorder %s63, %s64
      %p73 = scmp.eq.s32.totalorder %s16, 0
      %p74 = por %p72, %p73
      %p75 = scmp.ne.s32.totalorder %s63, %s64
      %p76 = scmp.eq.s32.totalorder %s17, 1
      %p77 = por %p75, %p76
      %p79 = scmp.ne.s32.totalorder %s64, %s78
      %p80 = scmp.eq.s32.totalorder %s17, 0
      %p81 = por %p79, %p80
      %p82 = scmp.le.s32.totalorder 1, %s11
      %p83 = scmp.lt.s32.totalorder %s11, 3
      %p84 = pnand %p82, %p83
      %p85 = pneg %p84
      // Predicated region
      $region9: #{tpu_custom_call.1} parent=5 // pred_check
        _
      $region10: #{tpu_custom_call.1} parent=5 // pred_check_branch
        %87 = sbr.rel (%p84) target = $region12
      $region11: #{tpu_custom_call.1} parent=5 // pred_region
        %s88 = ssub.s32 %s11, 1
        // Predicated region
        $region13: #{tpu_custom_call.1} parent=11 // pred_check
          %p89 = pneg %p32
        $region14: #{tpu_custom_call.1} parent=11 // pred_check_branch
          %91 = sbr.rel (%p89) target = $region16
        $region15: #{tpu_custom_call.1} parent=11 // pred_region
          %93 = vsyncadd [#allocation3], 0
          %s95 = sshll.u32 %s0, 4
          %s96 = int_to_ptr.hbm [resolvable:$true] %s95
          %s97 = sshll.u32 [#allocation2], 4
          %s98 = int_to_ptr.vmem [resolvable:$true] %s97
          %100 = dma.hbm_to_vmem [thread:$0]  %s96, 128, %s98, [#allocation3]
        $region16: #{tpu_custom_call.1} parent=11 // pred_fallthru
          _
        // Predicated region
        $region17: #{tpu_custom_call.1} parent=11 // pred_check
          %p101 = pneg %p53
        $region18: #{tpu_custom_call.1} parent=11 // pred_check_branch
          %103 = sbr.rel (%p101) target = $region20
        $region19: #{tpu_custom_call.1} parent=11 // pred_region
          %105 = vsyncadd [#allocation6], 0
          %s107 = sshll.u32 %s1, 4
          %s108 = int_to_ptr.hbm [resolvable:$true] %s107
          %s109 = sshll.u32 [#allocation5], 4
          %s110 = int_to_ptr.vmem [resolvable:$true] %s109
          %112 = dma.hbm_to_vmem [thread:$0]  %s108, 128, %s110, [#allocation6]
        $region20: #{tpu_custom_call.1} parent=11 // pred_fallthru
          _
      $region12: #{tpu_custom_call.1} parent=5 // pred_fallthru
        _
      %p113 = scmp.lt.s32.totalorder %s11, 2
      // Predicated region
      $region21: #{tpu_custom_call.1} parent=5 // pred_check
        %p114 = pneg %p113
      $region22: #{tpu_custom_call.1} parent=5 // pred_check_branch
        %116 = sbr.rel (%p114) target = $region24
      $region23: #{tpu_custom_call.1} parent=5 // pred_region
        _
      $region24: #{tpu_custom_call.1} parent=5 // pred_fallthru
        _
      %p117 = scmp.le.s32.totalorder 1, %s11
      %p118 = scmp.lt.s32.totalorder %s11, 3
      %p119 = pnand %p117, %p118
      %p120 = pneg %p119
      // Predicated region
      $region25: #{tpu_custom_call.1} parent=5 // pred_check
        _
      $region26: #{tpu_custom_call.1} parent=5 // pred_check_branch
        %122 = sbr.rel (%p119) target = $region28
      $region27: #{tpu_custom_call.1} parent=5 // pred_region
        %s123 = ssub.s32 %s11, 1
        // Predicated region
        $region29: #{tpu_custom_call.1} parent=27 // pred_check
          %p124 = pneg %p32
        $region30: #{tpu_custom_call.1} parent=27 // pred_check_branch
          %126 = sbr.rel (%p124) target = $region32
        $region31: #{tpu_custom_call.1} parent=27 // pred_region
          %128 = dma.done [#allocation3], 128
        $region32: #{tpu_custom_call.1} parent=27 // pred_fallthru
          _
        // Predicated region
        $region33: #{tpu_custom_call.1} parent=27 // pred_check
          %p129 = pneg %p53
        $region34: #{tpu_custom_call.1} parent=27 // pred_check_branch
          %131 = sbr.rel (%p129) target = $region36
        $region35: #{tpu_custom_call.1} parent=27 // pred_region
          %133 = dma.done [#allocation6], 128
        $region36: #{tpu_custom_call.1} parent=27 // pred_fallthru
          _
        %p134 = pneg %p32
        %p135 = pneg %p29
        %p136 = pneg %p53
        %p137 = pneg %p50
        %p138 = pneg %p74
        %p139 = pneg %p71
        %v140 = vld [vmem:[#allocation2] sm:$0xff]
        %v141 = vld [vmem:[#allocation5] sm:$0xff]
        %v142 = vadd.f32 %v140, %v141
        %143 = vst [vmem:[#allocation7] sm:$0xff] %v142
        // Predicated region
        $region37: #{tpu_custom_call.1} parent=27 // pred_check
          %p144 = pneg %p71
        $region38: #{tpu_custom_call.1} parent=27 // pred_check_branch
          %146 = sbr.rel (%p144) target = $region40
        $region39: #{tpu_custom_call.1} parent=27 // pred_region
          %148 = vsyncadd [#allocation4], 0
          %s150 = sshll.u32 [#allocation7], 4
          %s151 = int_to_ptr.vmem [resolvable:$true] %s150
          %s152 = sshll.u32 %s2, 4
          %s153 = int_to_ptr.hbm [resolvable:$true] %s152
          %155 = dma.vmem_to_hbm [thread:$0]  %s151, 128, %s153, [#allocation4]
        $region40: #{tpu_custom_call.1} parent=27 // pred_fallthru
          _
        // Predicated region
        $region41: #{tpu_custom_call.1} parent=27 // pred_check
          %p156 = pneg %p71
        $region42: #{tpu_custom_call.1} parent=27 // pred_check_branch
          %158 = sbr.rel (%p156) target = $region44
        $region43: #{tpu_custom_call.1} parent=27 // pred_region
          %160 = dma.done [#allocation4], 128
        $region44: #{tpu_custom_call.1} parent=27 // pred_fallthru
          _
      $region28: #{tpu_custom_call.1} parent=5 // pred_fallthru
        _
      %p161 = scmp.le.s32.totalorder 2, %s11
      // Predicated region
      $region45: #{tpu_custom_call.1} parent=5 // pred_check
        %p162 = pneg %p161
      $region46: #{tpu_custom_call.1} parent=5 // pred_check_branch
        %164 = sbr.rel (%p162) target = $region48
      $region47: #{tpu_custom_call.1} parent=5 // pred_region
        %s165 = ssub.s32 %s11, 2
      $region48: #{tpu_custom_call.1} parent=5 // pred_fallthru
        _
    $region6: #{tpu_custom_call.1} parent=1 // loop_footer
      %s15 = sadd.s32 1, %s11
    $region7: #{tpu_custom_call.1} parent=1 // loop_footer_branch
      %10 = sbr.rel target = $region3
    $region8: #{tpu_custom_call.1} parent=1 // loop_exit
      _
    %166 = vsyncpa [#allocation3], 1
    %s167 = scalar_lea.sflag [#allocation3], 1
    %168 = vsyncpa %s167, 1
    %169 = vsyncpa [#allocation6], 1
    %170 = vsyncpa [#allocation4], 1
    %s171 = scalar_lea.sflag [#allocation4], 1
    %172 = vsyncpa %s171, 1

</llo_original>
